<compile_context>
chip_gen: v5e
topology: v5e:2x2
jax: 0.10.0
libtpu: 0.0.40
codegen_flags: <defaults>
</compile_context>

<pallas_src>
import jax
import jax.numpy as jnp
from jax.experimental import pallas as pl
from jax.experimental.pallas import tpu as pltpu

HIDDEN_DIM = 512
BN_EPS = 1e-5
_STATS_CHUNK = 2048  # caps the z*z temporary at chunk*512*4 bytes (~4 MiB)


def _round_up(x, m):
    return ((x + m - 1) // m) * m


def _vmem_capacity_bytes():
    """Best-effort physical VMEM query; conservative 64 MiB fallback (safe on all gens)."""
    try:
        cap = getattr(pltpu.get_tpu_info(), "vmem_capacity_bytes", None)
        if cap:
            return int(cap)
    except Exception:
        pass
    return 64 * 2**20


def _col_mean_var(z, inv_b):
    """Single-pass per-column mean/var (biased), row-chunked to cap the z*z temp."""
    b, _ = z.shape
    chunk = min(_STATS_CHUNK, b)
    s = jnp.zeros((1, z.shape[1]), jnp.float32)
    ss = jnp.zeros((1, z.shape[1]), jnp.float32)
    for i in range(0, b, chunk):              # static trip count; 1 iter for small B
        zc = z[i:i + chunk]
        s = s + jnp.sum(zc, axis=0, keepdims=True)
        ss = ss + jnp.sum(zc * zc, axis=0, keepdims=True)
    mean = s * inv_b
    # Clamp: catastrophic cancellation can make E[z^2]-mean^2 slightly negative.
    var = jnp.maximum(ss * inv_b - mean * mean, 0.0)
    return mean, var


def _adv_classifier_kernel(x_ref,
                           w1_ref, g1_ref, bt1_ref,
                           w2_ref, g2_ref, bt2_ref,
                           w3_ref, b3_ref,
                           out_ref):
    inv_b = jnp.float32(1.0 / x_ref.shape[0])

    # fc1: bf16 MXU operands, f32 accumulation. Bias omitted (cancelled by BN mean).
    # (d_in=32 underfills the MXU K pass but fc1 is <6% of FLOPs; no K padding.)
    z = jnp.dot(x_ref[...].astype(jnp.bfloat16), w1_ref[...],
                preferred_element_type=jnp.float32)

    # bn1 + ReLU: folded affine (f32 VPU math, rsqrt on EUP).
    mean, var = _col_mean_var(z, inv_b)
    scale = g1_ref[...] * jax.lax.rsqrt(var + BN_EPS)
    shift = bt1_ref[...] - mean * scale
    z = jnp.maximum(z * scale + shift, 0.0)

    # fc2 (512x512, MXU-aligned). Bias omitted (cancelled by bn2 mean subtraction).
    z = jnp.dot(z.astype(jnp.bfloat16), w2_ref[...],
                preferred_element_type=jnp.float32)

    # bn2 + ReLU.
    mean, var = _col_mean_var(z, inv_b)
    scale = g2_ref[...] * jax.lax.rsqrt(var + BN_EPS)
    shift = bt2_ref[...] - mean * scale
    z = jnp.maximum(z * scale + shift, 0.0)

    # classifier: output columns pre-padded to a multiple of 128 -> dense vst.
    out = jnp.dot(z.astype(jnp.bfloat16), w3_ref[...],
                  preferred_element_type=jnp.float32) + b3_ref[...]
    out_ref[...] = out.astype(out_ref.dtype)


def prepare_params(params):
    """One-time conversion to kernel-ready layout. Call once at init; reuse every step.

    bf16 matmul weights; classifier weight/bias lane-padded to a multiple of 128.
    """
    output_dim = params["w3"].shape[1]
    n_pad = _round_up(output_dim, 128)
    return {
        "w1": params["w1"].astype(jnp.bfloat16),
        "gamma1": params["gamma1"].astype(jnp.float32),
        "beta1": params["beta1"].astype(jnp.float32),
        "w2": params["w2"].astype(jnp.bfloat16),
        "gamma2": params["gamma2"].astype(jnp.float32),
        "beta2": params["beta2"].astype(jnp.float32),
        "w3": jnp.pad(params["w3"],
                      ((0, 0), (0, n_pad - output_dim))).astype(jnp.bfloat16),
        "b3": jnp.pad(params["b3"],
                      ((0, 0), (0, n_pad - output_dim))).astype(jnp.float32),
        "output_dim": output_dim,
        "n_pad": n_pad,
    }


def adversarial_classifier_forward(embeddings, prepared, alpha):
    """Forward of AdversarialClassifier. Returns (preds, preds_detached).

    `prepared` is the output of prepare_params() (persistent bf16/padded weights).
    For best MXU utilization, batch should be a multiple of 256 (v6e/v7x) or 128 (v5e).
    """
    del alpha  # only affects the backward pass (gradient reversal)
    B, d_in = embeddings.shape
    hidden = prepared["w1"].shape[1]
    output_dim = prepared["output_dim"]
    n_pad = prepared["n_pad"]

    inputs = (
        embeddings,
        prepared["w1"], prepared["gamma1"], prepared["beta1"],
        prepared["w2"], prepared["gamma2"], prepared["beta2"],
        prepared["w3"], prepared["b3"],
    )

    out_bytes = B * n_pad * 2  # bf16 output
    bytes_accessed = sum(int(a.size) * a.dtype.itemsize for a in inputs) + out_bytes
    flops = 2 * B * (d_in * hidden + hidden * hidden + hidden * n_pad)

    # Generation-aware VMEM budget: inputs + a few [B, hidden] f32 activation
    # copies with headroom, capped ~16 MiB below physical VMEM (v7x: ~48 MiB
    # ceiling, v5e/v6e: ~112 MiB ceiling).
    cap = _vmem_capacity_bytes()
    ceiling = max(32 * 2**20, cap - 16 * 2**20)
    vmem_limit = int(min(ceiling,
                         max(16 * 2**20, 2 * bytes_accessed + 8 * B * hidden * 4)))

    vmem = pl.BlockSpec(memory_space=pltpu.MemorySpace.VMEM)

    preds_padded = pl.pallas_call(
        _adv_classifier_kernel,
        out_shape=jax.ShapeDtypeStruct((B, n_pad), jnp.bfloat16),
        in_specs=[vmem] * len(inputs),
        out_specs=vmem,
        compiler_params=pltpu.CompilerParams(vmem_limit_bytes=vmem_limit),
        cost_estimate=pl.CostEstimate(flops=flops,
                                      transcendentals=2 * hidden,
                                      bytes_accessed=bytes_accessed),
    )(*inputs)

    # Downstream consumers that tolerate bf16 / the padded slab can skip this.
    preds = preds_padded[:, :output_dim].astype(jnp.float32)
    # Forward values are identical for the reversed and detached branches.
    return preds, preds


def init_params(key, input_dim, output_dim, hidden_dim=HIDDEN_DIM):
    """Deterministic synthetic parameters (Linear weights stored [in, out], f32)."""
    ks = jax.random.split(key, 6)

    def lin(kw, kb, fan_in, fan_out):
        bound = 1.0 / jnp.sqrt(fan_in)
        w = jax.random.uniform(kw, (fan_in, fan_out), jnp.float32, -bound, bound)
        b = jax.random.uniform(kb, (1, fan_out), jnp.float32, -bound, bound)
        return w, b

    w1, b1 = lin(ks[0], ks[1], input_dim, hidden_dim)
    w2, b2 = lin(ks[2], ks[3], hidden_dim, hidden_dim)
    w3, b3 = lin(ks[4], ks[5], hidden_dim, output_dim)

    return {
        "w1": w1, "b1": b1,  # b1/b2 kept for module parity; BN cancels them in forward
        "gamma1": jnp.ones((1, hidden_dim), jnp.float32),
        "beta1": jnp.zeros((1, hidden_dim), jnp.float32),
        "w2": w2, "b2": b2,
        "gamma2": jnp.ones((1, hidden_dim), jnp.float32),
        "beta2": jnp.zeros((1, hidden_dim), jnp.float32),
        "w3": w3, "b3": b3,
    }


def _reference_forward(x, p):
    """Pure-JAX f32 reference with exact PyTorch forward semantics (incl. b1/b2)."""
    z = x @ p["w1"] + p["b1"]
    m = z.mean(0, keepdims=True)
    v = ((z - m) ** 2).mean(0, keepdims=True)
    z = (z - m) / jnp.sqrt(v + BN_EPS) * p["gamma1"] + p["beta1"]
    z = jnp.maximum(z, 0.0)
    z = z @ p["w2"] + p["b2"]
    m = z.mean(0, keepdims=True)
    v = ((z - m) ** 2).mean(0, keepdims=True)
    z = (z - m) / jnp.sqrt(v + BN_EPS) * p["gamma2"] + p["beta2"]
    z = jnp.maximum(z, 0.0)
    return z @ p["w3"] + p["b3"]


if __name__ == "__main__":
    key = jax.random.PRNGKey(0)
    k_x, k_p = jax.random.split(key)

    batch, input_dim, output_dim = 8, 32, 4  # batch kept a multiple of 8 (f32 sublanes)
    x = jax.random.normal(k_x, (batch, input_dim), jnp.float32)
    params = init_params(k_p, input_dim, output_dim)
    prepared = prepare_params(params)  # one-time bf16 cast + lane padding
    alpha = 0.5

    preds, preds_detached = adversarial_classifier_forward(x, prepared, alpha)
    preds = jax.block_until_ready(preds)
    preds_detached = jax.block_until_ready(preds_detached)

    ref = _reference_forward(x, params)
    assert preds.shape == (batch, output_dim)
    # bf16 MXU operands / bf16 output => loose tolerance vs. the full-f32 reference.
    assert jnp.allclose(preds, ref, atol=3e-2, rtol=3e-2), \
        float(jnp.max(jnp.abs(preds - ref)))
    assert jnp.allclose(preds_detached, ref, atol=3e-2, rtol=3e-2)

    print("KERNEL_OK")
</pallas_src>

<mosaic_0001>
module attributes {stable_mosaic.version = 11 : i64} {
  func.func @_adv_classifier_kernel(%arg0: memref<8x32xf32, #tpu.memory_space<vmem>>, %arg1: memref<32x512xbf16, #tpu.memory_space<vmem>>, %arg2: memref<1x512xf32, #tpu.memory_space<vmem>>, %arg3: memref<1x512xf32, #tpu.memory_space<vmem>>, %arg4: memref<512x512xbf16, #tpu.memory_space<vmem>>, %arg5: memref<1x512xf32, #tpu.memory_space<vmem>>, %arg6: memref<1x512xf32, #tpu.memory_space<vmem>>, %arg7: memref<512x128xbf16, #tpu.memory_space<vmem>>, %arg8: memref<1x128xf32, #tpu.memory_space<vmem>>, %arg9: memref<8x128xbf16, #tpu.memory_space<vmem>>) attributes {dimension_semantics = [], scalar_prefetch = 0 : i64, scratch_operands = 0 : i64, tpu.core_type = #tpu.core_type<tc>} {
    %c0 = arith.constant 0 : index
    %c0_0 = arith.constant 0 : index
    %0 = vector.load %arg0[%c0, %c0_0] : memref<8x32xf32, #tpu.memory_space<vmem>>, vector<8x32xf32>
    %1 = arith.truncf %0 : vector<8x32xf32> to vector<8x32xbf16>
    %c0_1 = arith.constant 0 : index
    %c0_2 = arith.constant 0 : index
    %2 = vector.load %arg1[%c0_1, %c0_2] : memref<32x512xbf16, #tpu.memory_space<vmem>>, vector<32x512xbf16>
    %cst = arith.constant dense<0.000000e+00> : vector<8x512xf32>
    %3 = tpu.matmul %1, %2, %cst {dimension_numbers = #tpu.dot_dimension_numbers<[1], [0], [0], [1], [0, 0, 1, 1], [], []>} : vector<8x32xbf16>, vector<32x512xbf16>, vector<8x512xf32> -> vector<8x512xf32>
    %cst_3 = arith.constant 0.000000e+00 : f32
    %4 = vector.broadcast %cst_3 : f32 to vector<1x512xf32>
    %cst_4 = arith.constant 0.000000e+00 : f32
    %5 = vector.broadcast %cst_4 : f32 to vector<1x512xf32>
    %cst_5 = arith.constant dense<0.000000e+00> : vector<512xf32>
    %6 = vector.multi_reduction <add>, %3, %cst_5 [0] : vector<8x512xf32> to vector<512xf32>
    %7 = vector.shape_cast %6 : vector<512xf32> to vector<1x512xf32>
    %8 = arith.addf %4, %7 : vector<1x512xf32>
    %9 = arith.mulf %3, %3 : vector<8x512xf32>
    %cst_6 = arith.constant dense<0.000000e+00> : vector<512xf32>
    %10 = vector.multi_reduction <add>, %9, %cst_6 [0] : vector<8x512xf32> to vector<512xf32>
    %11 = vector.shape_cast %10 : vector<512xf32> to vector<1x512xf32>
    %12 = arith.addf %5, %11 : vector<1x512xf32>
    %cst_7 = arith.constant 1.250000e-01 : f32
    %13 = vector.broadcast %cst_7 : f32 to vector<1x512xf32>
    %14 = arith.mulf %8, %13 : vector<1x512xf32>
    %cst_8 = arith.constant 1.250000e-01 : f32
    %15 = vector.broadcast %cst_8 : f32 to vector<1x512xf32>
    %16 = arith.mulf %12, %15 : vector<1x512xf32>
    %17 = arith.mulf %14, %14 : vector<1x512xf32>
    %18 = arith.subf %16, %17 : vector<1x512xf32>
    %cst_9 = arith.constant 0.000000e+00 : f32
    %19 = vector.broadcast %cst_9 : f32 to vector<1x512xf32>
    %20 = arith.maximumf %18, %19 : vector<1x512xf32>
    %c0_10 = arith.constant 0 : index
    %c0_11 = arith.constant 0 : index
    %21 = vector.load %arg2[%c0_10, %c0_11] : memref<1x512xf32, #tpu.memory_space<vmem>>, vector<1x512xf32>
    %cst_12 = arith.constant 9.99999974E-6 : f32
    %22 = vector.broadcast %cst_12 : f32 to vector<1x512xf32>
    %23 = arith.addf %20, %22 : vector<1x512xf32>
    %24 = math.rsqrt %23 : vector<1x512xf32>
    %25 = arith.mulf %21, %24 : vector<1x512xf32>
    %c0_13 = arith.constant 0 : index
    %c0_14 = arith.constant 0 : index
    %26 = vector.load %arg3[%c0_13, %c0_14] : memref<1x512xf32, #tpu.memory_space<vmem>>, vector<1x512xf32>
    %27 = arith.mulf %14, %25 : vector<1x512xf32>
    %28 = arith.subf %26, %27 : vector<1x512xf32>
    %29 = vector.broadcast %25 : vector<1x512xf32> to vector<8x512xf32>
    %30 = arith.mulf %3, %29 : vector<8x512xf32>
    %31 = vector.broadcast %28 : vector<1x512xf32> to vector<8x512xf32>
    %32 = arith.addf %30, %31 : vector<8x512xf32>
    %cst_15 = arith.constant 0.000000e+00 : f32
    %33 = vector.broadcast %cst_15 : f32 to vector<8x512xf32>
    %34 = arith.maximumf %32, %33 : vector<8x512xf32>
    %35 = arith.truncf %34 : vector<8x512xf32> to vector<8x512xbf16>
    %c0_16 = arith.constant 0 : index
    %c0_17 = arith.constant 0 : index
    %36 = vector.load %arg4[%c0_16, %c0_17] : memref<512x512xbf16, #tpu.memory_space<vmem>>, vector<512x512xbf16>
    %cst_18 = arith.constant dense<0.000000e+00> : vector<8x512xf32>
    %37 = tpu.matmul %35, %36, %cst_18 {dimension_numbers = #tpu.dot_dimension_numbers<[1], [0], [0], [1], [0, 0, 1, 1], [], []>} : vector<8x512xbf16>, vector<512x512xbf16>, vector<8x512xf32> -> vector<8x512xf32>
    %cst_19 = arith.constant 0.000000e+00 : f32
    %38 = vector.broadcast %cst_19 : f32 to vector<1x512xf32>
    %cst_20 = arith.constant 0.000000e+00 : f32
    %39 = vector.broadcast %cst_20 : f32 to vector<1x512xf32>
    %cst_21 = arith.constant dense<0.000000e+00> : vector<512xf32>
    %40 = vector.multi_reduction <add>, %37, %cst_21 [0] : vector<8x512xf32> to vector<512xf32>
    %41 = vector.shape_cast %40 : vector<512xf32> to vector<1x512xf32>
    %42 = arith.addf %38, %41 : vector<1x512xf32>
    %43 = arith.mulf %37, %37 : vector<8x512xf32>
    %cst_22 = arith.constant dense<0.000000e+00> : vector<512xf32>
    %44 = vector.multi_reduction <add>, %43, %cst_22 [0] : vector<8x512xf32> to vector<512xf32>
    %45 = vector.shape_cast %44 : vector<512xf32> to vector<1x512xf32>
    %46 = arith.addf %39, %45 : vector<1x512xf32>
    %cst_23 = arith.constant 1.250000e-01 : f32
    %47 = vector.broadcast %cst_23 : f32 to vector<1x512xf32>
    %48 = arith.mulf %42, %47 : vector<1x512xf32>
    %cst_24 = arith.constant 1.250000e-01 : f32
    %49 = vector.broadcast %cst_24 : f32 to vector<1x512xf32>
    %50 = arith.mulf %46, %49 : vector<1x512xf32>
    %51 = arith.mulf %48, %48 : vector<1x512xf32>
    %52 = arith.subf %50, %51 : vector<1x512xf32>
    %cst_25 = arith.constant 0.000000e+00 : f32
    %53 = vector.broadcast %cst_25 : f32 to vector<1x512xf32>
    %54 = arith.maximumf %52, %53 : vector<1x512xf32>
    %c0_26 = arith.constant 0 : index
    %c0_27 = arith.constant 0 : index
    %55 = vector.load %arg5[%c0_26, %c0_27] : memref<1x512xf32, #tpu.memory_space<vmem>>, vector<1x512xf32>
    %cst_28 = arith.constant 9.99999974E-6 : f32
    %56 = vector.broadcast %cst_28 : f32 to vector<1x512xf32>
    %57 = arith.addf %54, %56 : vector<1x512xf32>
    %58 = math.rsqrt %57 : vector<1x512xf32>
    %59 = arith.mulf %55, %58 : vector<1x512xf32>
    %c0_29 = arith.constant 0 : index
    %c0_30 = arith.constant 0 : index
    %60 = vector.load %arg6[%c0_29, %c0_30] : memref<1x512xf32, #tpu.memory_space<vmem>>, vector<1x512xf32>
    %61 = arith.mulf %48, %59 : vector<1x512xf32>
    %62 = arith.subf %60, %61 : vector<1x512xf32>
    %63 = vector.broadcast %59 : vector<1x512xf32> to vector<8x512xf32>
    %64 = arith.mulf %37, %63 : vector<8x512xf32>
    %65 = vector.broadcast %62 : vector<1x512xf32> to vector<8x512xf32>
    %66 = arith.addf %64, %65 : vector<8x512xf32>
    %cst_31 = arith.constant 0.000000e+00 : f32
    %67 = vector.broadcast %cst_31 : f32 to vector<8x512xf32>
    %68 = arith.maximumf %66, %67 : vector<8x512xf32>
    %69 = arith.truncf %68 : vector<8x512xf32> to vector<8x512xbf16>
    %c0_32 = arith.constant 0 : index
    %c0_33 = arith.constant 0 : index
    %70 = vector.load %arg7[%c0_32, %c0_33] : memref<512x128xbf16, #tpu.memory_space<vmem>>, vector<512x128xbf16>
    %cst_34 = arith.constant dense<0.000000e+00> : vector<8x128xf32>
    %71 = tpu.matmul %69, %70, %cst_34 {dimension_numbers = #tpu.dot_dimension_numbers<[1], [0], [0], [1], [0, 0, 1, 1], [], []>} : vector<8x512xbf16>, vector<512x128xbf16>, vector<8x128xf32> -> vector<8x128xf32>
    %c0_35 = arith.constant 0 : index
    %c0_36 = arith.constant 0 : index
    %72 = vector.load %arg8[%c0_35, %c0_36] : memref<1x128xf32, #tpu.memory_space<vmem>>, vector<1x128xf32>
    %73 = vector.broadcast %72 : vector<1x128xf32> to vector<8x128xf32>
    %74 = arith.addf %71, %73 : vector<8x128xf32>
    %75 = arith.truncf %74 : vector<8x128xf32> to vector<8x128xbf16>
    %c0_37 = arith.constant 0 : index
    %c0_38 = arith.constant 0 : index
    %76 = vector.load %arg9[%c0_37, %c0_38] : memref<8x128xbf16, #tpu.memory_space<vmem>>, vector<8x128xbf16>
    tpu.vector_store %arg9[%c0_37, %c0_38], %75 {strides = array<i32>} : memref<8x128xbf16, #tpu.memory_space<vmem>>, vector<8x128xbf16>,
    return
  }
}

</mosaic_0001>

<llo_original>
// kernel: tpu_custom_call.1
$region0: #{tpu_custom_call.1}
  #allocation0 [shape = 'u32[]', space=smem, size = 0x4, offset = 0x4, fixed_abs, tag = 'smem constant byte address 0x4 - core index']
  #allocation1 [shape = 'u32[72,128]{1,0:T(1,128)}', space=vmem, size = 0x9000, scoped, tag = 'internal scratch']
  %s0 = inlined_call_operand.hbm [shape: f32[8,32], index: 0, kind: input, shape index: {}]
  %s1 = inlined_call_operand.hbm [shape: bf16[32,512], index: 1, kind: input, shape index: {}]
  %s2 = inlined_call_operand.hbm [shape: f32[1,512], index: 2, kind: input, shape index: {}]
  %s3 = inlined_call_operand.hbm [shape: f32[1,512], index: 3, kind: input, shape index: {}]
  %s4 = inlined_call_operand.hbm [shape: bf16[512,512], index: 4, kind: input, shape index: {}]
  %s5 = inlined_call_operand.vmem [shape: f32[1,512], index: 5, kind: input, shape index: {}]
  %s6 = inlined_call_operand.hbm [shape: f32[1,512], index: 6, kind: input, shape index: {}]
  %s7 = inlined_call_operand.hbm [shape: bf16[512,128], index: 7, kind: input, shape index: {}]
  %s8 = inlined_call_operand.vmem [shape: f32[1,128], index: 8, kind: input, shape index: {}]
  %s9 = inlined_call_operand.hbm [shape: bf16[8,128], index: 9, kind: output, shape index: {}]
  %s10 = sld [smem:[#allocation0]]
  $region74: #{tpu_custom_call.1} parent=0
    _
  %s12 = ssub.s32 1, %s10
  %s13 = scalar_select 0, %s12, %s10
  $region1: #{tpu_custom_call.1} parent=0
    #allocation2 [shape = 'u8[4096]{0}', space=vmem, size = 0x1000, scoped, tag = 'input window, operand 0, single buffered']
    #allocation3 [shape = 's32[1]{0}', space=sflag, size = 0x4, scoped, tag = 'scoped memory for tpu_custom_call.1']
    #allocation4 [shape = 's32[1]{0}', space=sflag, size = 0x4, scoped, tag = 'scoped memory for tpu_custom_call.1']
    #allocation5 [shape = 'u8[32768]{0}', space=vmem, size = 0x8000, scoped, tag = 'input window, operand 1, single buffered']
    #allocation6 [shape = 's32[1]{0}', space=sflag, size = 0x4, scoped, tag = 'scoped memory for tpu_custom_call.1']
    #allocation7 [shape = 'u8[2048]{0}', space=vmem, size = 0x800, scoped, tag = 'input window, operand 2, single buffered']
    #allocation8 [shape = 'u8[2048]{0}', space=vmem, size = 0x800, scoped, tag = 'input window, operand 3, single buffered']
    #allocation9 [shape = 's32[1]{0}', space=sflag, size = 0x4, scoped, tag = 'scoped memory for tpu_custom_call.1']
    #allocation10 [shape = 'u8[524288]{0}', space=vmem, size = 0x80000, scoped, tag = 'input window, operand 4, single buffered']
    #allocation11 [shape = 'u8[2048]{0}', space=vmem, size = 0x800, scoped, tag = 'input window, operand 6, single buffered']
    #allocation12 [shape = 's32[1]{0}', space=sflag, size = 0x4, scoped, tag = 'scoped memory for tpu_custom_call.1']
    #allocation13 [shape = 'u8[131072]{0}', space=vmem, size = 0x20000, scoped, tag = 'input window, operand 7, single buffered']
    #allocation14 [shape = 'u8[2048]{0}', space=vmem, size = 0x800, scoped, tag = 'output window, operand 0, single buffered']
    %14 = vsyncpa [#allocation3], 0
    %15 = vsyncpa [#allocation6], 0
    %16 = vsyncpa [#allocation9], 0
    %17 = vsyncpa [#allocation12], 0
    %18 = vsyncpa [#allocation4], 0
    // Predicated region
    $region2: #{tpu_custom_call.1} parent=1 // pred_check
      _
    $region3: #{tpu_custom_call.1} parent=1 // pred_check_branch
      %20 = sbr.rel (0) target = $region5
    $region4: #{tpu_custom_call.1} parent=1 // pred_region
      %22 = vsyncadd [#allocation3], 0
      %s24 = sshll.u32 %s0, 4
      %s25 = int_to_ptr.hbm [resolvable:$true] %s24
      %s26 = sshll.u32 [#allocation2], 4
      %s27 = int_to_ptr.vmem [resolvable:$true] %s26
      %29 = dma.hbm_to_vmem [thread:$0]  %s25, 128, %s27, [#allocation3]
    $region5: #{tpu_custom_call.1} parent=1 // pred_fallthru
      _
    // Predicated region
    $region6: #{tpu_custom_call.1} parent=1 // pred_check
      _
    $region7: #{tpu_custom_call.1} parent=1 // pred_check_branch
      %31 = sbr.rel (0) target = $region9
    $region8: #{tpu_custom_call.1} parent=1 // pred_region
      %33 = vsyncadd [#allocation6], 0
      %s34 = sshll.u32 %s1, 4
      %s35 = int_to_ptr.hbm [resolvable:$true] %s34
      %s36 = sshll.u32 [#allocation5], 4
      %s37 = int_to_ptr.vmem [resolvable:$true] %s36
      %42 = dma.hbm_to_vmem [thread:$0]  %s35, 1024, %s37, [#allocation6], 256, 256, 16
    $region9: #{tpu_custom_call.1} parent=1 // pred_fallthru
      _
    // Predicated region
    $region10: #{tpu_custom_call.1} parent=1 // pred_check
      _
    $region11: #{tpu_custom_call.1} parent=1 // pred_check_branch
      %44 = sbr.rel (0) target = $region13
    $region12: #{tpu_custom_call.1} parent=1 // pred_region
      %46 = vsyncadd [#allocation6], 0
      %s48 = sshll.u32 %s2, 4
      %s49 = int_to_ptr.hbm [resolvable:$true] %s48
      %s50 = sshll.u32 [#allocation7], 4
      %s51 = int_to_ptr.vmem [resolvable:$true] %s50
      %53 = dma.hbm_to_vmem [thread:$0]  %s49, 64, %s51, [#allocation6]
    $region13: #{tpu_custom_call.1} parent=1 // pred_fallthru
      _
    // Predicated region
    $region14: #{tpu_custom_call.1} parent=1 // pred_check
      _
    $region15: #{tpu_custom_call.1} parent=1 // pred_check_branch
      %55 = sbr.rel (0) target = $region17
    $region16: #{tpu_custom_call.1} parent=1 // pred_region
      %57 = vsyncadd [#allocation9], 0
      %s59 = sshll.u32 %s3, 4
      %s60 = int_to_ptr.hbm [resolvable:$true] %s59
      %s61 = sshll.u32 [#allocation8], 4
      %s62 = int_to_ptr.vmem [resolvable:$true] %s61
      %64 = dma.hbm_to_vmem [thread:$0]  %s60, 64, %s62, [#allocation9]
    $region17: #{tpu_custom_call.1} parent=1 // pred_fallthru
      _
    // Predicated region
    $region18: #{tpu_custom_call.1} parent=1 // pred_check
      _
    $region19: #{tpu_custom_call.1} parent=1 // pred_check_branch
      %66 = sbr.rel (0) target = $region21
    $region20: #{tpu_custom_call.1} parent=1 // pred_region
      %68 = vsyncadd [#allocation9], 0
      %s69 = sshll.u32 %s4, 4
      %s70 = int_to_ptr.hbm [resolvable:$true] %s69
      %s71 = sshll.u32 [#allocation10], 4
      %s72 = int_to_ptr.vmem [resolvable:$true] %s71
      %77 = dma.hbm_to_vmem [thread:$0]  %s70, 16384, %s72, [#allocation9], 256, 256, 16
    $region21: #{tpu_custom_call.1} parent=1 // pred_fallthru
      _
    // Predicated region
    $region22: #{tpu_custom_call.1} parent=1 // pred_check
      _
    $region23: #{tpu_custom_call.1} parent=1 // pred_check_branch
      %79 = sbr.rel (0) target = $region25
    $region24: #{tpu_custom_call.1} parent=1 // pred_region
      _
    $region25: #{tpu_custom_call.1} parent=1 // pred_fallthru
      _
    // Predicated region
    $region26: #{tpu_custom_call.1} parent=1 // pred_check
      _
    $region27: #{tpu_custom_call.1} parent=1 // pred_check_branch
      %81 = sbr.rel (0) target = $region29
    $region28: #{tpu_custom_call.1} parent=1 // pred_region
      %83 = vsyncadd [#allocation12], 0
      %s85 = sshll.u32 %s6, 4
      %s86 = int_to_ptr.hbm [resolvable:$true] %s85
      %s87 = sshll.u32 [#allocation11], 4
      %s88 = int_to_ptr.vmem [resolvable:$true] %s87
      %90 = dma.hbm_to_vmem [thread:$0]  %s86, 64, %s88, [#allocation12]
    $region29: #{tpu_custom_call.1} parent=1 // pred_fallthru
      _
    // Predicated region
    $region30: #{tpu_custom_call.1} parent=1 // pred_check
      _
    $region31: #{tpu_custom_call.1} parent=1 // pred_check_branch
      %92 = sbr.rel (0) target = $region33
    $region32: #{tpu_custom_call.1} parent=1 // pred_region
      %94 = vsyncadd [#allocation12], 0
      %s95 = sshll.u32 %s7, 4
      %s96 = int_to_ptr.hbm [resolvable:$true] %s95
      %s97 = sshll.u32 [#allocation13], 4
      %s98 = int_to_ptr.vmem [resolvable:$true] %s97
      %103 = dma.hbm_to_vmem [thread:$0]  %s96, 4096, %s98, [#allocation12], 64, 64, 4
    $region33: #{tpu_custom_call.1} parent=1 // pred_fallthru
      _
    // Predicated region
    $region34: #{tpu_custom_call.1} parent=1 // pred_check
      _
    $region35: #{tpu_custom_call.1} parent=1 // pred_check_branch
      %105 = sbr.rel (0) target = $region37
    $region36: #{tpu_custom_call.1} parent=1 // pred_region
      _
    $region37: #{tpu_custom_call.1} parent=1 // pred_fallthru
      _
    // Predicated region
    $region38: #{tpu_custom_call.1} parent=1 // pred_check
      _
    $region39: #{tpu_custom_call.1} parent=1 // pred_check_branch
      %107 = sbr.rel (0) target = $region41
    $region40: #{tpu_custom_call.1} parent=1 // pred_region
      %109 = dma.done [#allocation3], 128
    $region41: #{tpu_custom_call.1} parent=1 // pred_fallthru
      _
    // Predicated region
    $region42: #{tpu_custom_call.1} parent=1 // pred_check
      _
    $region43: #{tpu_custom_call.1} parent=1 // pred_check_branch
      %111 = sbr.rel (0) target = $region45
    $region44: #{tpu_custom_call.1} parent=1 // pred_region
      %113 = dma.done [#allocation6], 1024
    $region45: #{tpu_custom_call.1} parent=1 // pred_fallthru
      _
    // Predicated region
    $region46: #{tpu_custom_call.1} parent=1 // pred_check
      _
    $region47: #{tpu_custom_call.1} parent=1 // pred_check_branch
      %115 = sbr.rel (0) target = $region49
    $region48: #{tpu_custom_call.1} parent=1 // pred_region
      %117 = dma.done [#allocation6], 64
    $region49: #{tpu_custom_call.1} parent=1 // pred_fallthru
      _
    // Predicated region
    $region50: #{tpu_custom_call.1} parent=1 // pred_check
      _
    $region51: #{tpu_custom_call.1} parent=1 // pred_check_branch
      %119 = sbr.rel (0) target = $region53
    $region52: #{tpu_custom_call.1} parent=1 // pred_region
      %121 = dma.done [#allocation9], 64
    $region53: #{tpu_custom_call.1} parent=1 // pred_fallthru
      _
    // Predicated region
    $region54: #{tpu_custom_call.1} parent=1 // pred_check
      _
    $region55: #{tpu_custom_call.1} parent=1 // pred_check_branch
      %123 = sbr.rel (0) target = $region57
    $region56: #{tpu_custom_call.1} parent=1 // pred_region
      %125 = dma.done [#allocation9], 16384
    $region57: #{tpu_custom_call.1} parent=1 // pred_fallthru
      _
    // Predicated region
    $region58: #{tpu_custom_call.1} parent=1 // pred_check
      _
    $region59: #{tpu_custom_call.1} parent=1 // pred_check_branch
      %127 = sbr.rel (0) target = $region61
    $region60: #{tpu_custom_call.1} parent=1 // pred_region
      %129 = dma.done [#allocation12], 64
    $region61: #{tpu_custom_call.1} parent=1 // pred_fallthru
      _
    // Predicated region
    $region62: #{tpu_custom_call.1} parent=1 // pred_check
      _
    $region63: #{tpu_custom_call.1} parent=1 // pred_check_branch
      %131 = sbr.rel (0) target = $region65
    $region64: #{tpu_custom_call.1} parent=1 // pred_region
      %133 = dma.done [#allocation12], 4096
    $region65: #{tpu_custom_call.1} parent=1 // pred_fallthru
      _
    %v135 = vld [vmem:[#allocation2] sm:$0xff]
    %v136 = vpack.c.bf16 %v135, %v135
    %v137 = vld [vmem:[#allocation5] sm:$0xff]
    %v138 = vld [vmem:[#allocation5 + $0x8] sm:$0xff]
    %v139 = vld [vmem:[#allocation5 + $0x10] sm:$0xff]
    %v140 = vld [vmem:[#allocation5 + $0x18] sm:$0xff]
    %v141 = vld [vmem:[#allocation5 + $0x20] sm:$0xff]
    %v142 = vld [vmem:[#allocation5 + $0x28] sm:$0xff]
    %v143 = vld [vmem:[#allocation5 + $0x30] sm:$0xff]
    %v144 = vld [vmem:[#allocation5 + $0x38] sm:$0xff]
    %v153 = vunpack.c.l.b16 %v137
    %v154 = vunpack.c.h.b16 %v137
    %v155 = vunpack.c.l.b16 %v138
    %v156 = vunpack.c.h.b16 %v138
    %v157 = vunpack.c.l.b16 %v139
    %v158 = vunpack.c.h.b16 %v139
    %v159 = vunpack.c.l.b16 %v140
    %v160 = vunpack.c.h.b16 %v140
    %v161 = vunpack.c.l.b16 %v141
    %v162 = vunpack.c.h.b16 %v141
    %v163 = vunpack.c.l.b16 %v142
    %v164 = vunpack.c.h.b16 %v142
    %v165 = vunpack.c.l.b16 %v143
    %v166 = vunpack.c.h.b16 %v143
    %v167 = vunpack.c.l.b16 %v144
    %v168 = vunpack.c.h.b16 %v144
    %v169 = vpack.c.b16 %v157, %v153
    %v170 = vpack.c.b16 %v158, %v154
    %v171 = vpack.c.b16 %v159, %v155
    %v172 = vpack.c.b16 %v160, %v156
    %v173 = vpack.c.b16 %v165, %v161
    %v174 = vpack.c.b16 %v166, %v162
    %v175 = vpack.c.b16 %v167, %v163
    %v176 = vpack.c.b16 %v168, %v164
    %vm185 = vcmask 261120
    %v187 = vsel %vm185, %v136, 0
    %189 = vmatpush.bf16.msra.mxu0 0
    %190 = vmatpush.bf16.msra.mxu0 0
    %191 = vmatpush.bf16.msra.mxu0 0
    %192 = vmatpush.bf16.msra.mxu0 0
    %193 = vmatpush.bf16.msra.mxu0 0
    %194 = vmatpush.bf16.msra.mxu0 0
    %195 = vmatpush.bf16.msra.mxu0 %v173
    %196 = vmatpush.bf16.msra.mxu0 %v169
    %197 = vmatmul.bf16.gmra.mxu0 %v187
    %v198 = vpop.f32.mrf.mxu0
    %v199 = vadd.f32 0.0, %v198
    %v200 = vpop.f32.mrf.mxu0
    %201 = vdwg.mxu0
    %202 = vmatpush.bf16.msra.mxu0 0
    %203 = vmatpush.bf16.msra.mxu0 0
    %204 = vmatpush.bf16.msra.mxu0 0
    %205 = vmatpush.bf16.msra.mxu0 0
    %206 = vmatpush.bf16.msra.mxu0 0
    %207 = vmatpush.bf16.msra.mxu0 0
    %208 = vmatpush.bf16.msra.mxu0 %v174
    %209 = vmatpush.bf16.msra.mxu0 %v170
    %210 = vmatmul.bf16.gmra.mxu0 %v187
    %v211 = vpop.f32.mrf.mxu0
    %v212 = vadd.f32 0.0, %v211
    %v213 = vpop.f32.mrf.mxu0
    %214 = vdwg.mxu0
    %215 = vmatpush.bf16.msra.mxu0 0
    %216 = vmatpush.bf16.msra.mxu0 0
    %217 = vmatpush.bf16.msra.mxu0 0
    %218 = vmatpush.bf16.msra.mxu0 0
    %219 = vmatpush.bf16.msra.mxu0 0
    %220 = vmatpush.bf16.msra.mxu0 0
    %221 = vmatpush.bf16.msra.mxu0 %v175
    %222 = vmatpush.bf16.msra.mxu0 %v171
    %223 = vmatmul.bf16.gmra.mxu0 %v187
    %v224 = vpop.f32.mrf.mxu0
    %v225 = vadd.f32 0.0, %v224
    %v226 = vpop.f32.mrf.mxu0
    %227 = vdwg.mxu0
    %228 = vmatpush.bf16.msra.mxu0 0
    %229 = vmatpush.bf16.msra.mxu0 0
    %230 = vmatpush.bf16.msra.mxu0 0
    %231 = vmatpush.bf16.msra.mxu0 0
    %232 = vmatpush.bf16.msra.mxu0 0
    %233 = vmatpush.bf16.msra.mxu0 0
    %234 = vmatpush.bf16.msra.mxu0 %v176
    %235 = vmatpush.bf16.msra.mxu0 %v172
    %236 = vmatmul.bf16.gmra.mxu0 %v187
    %v237 = vpop.f32.mrf.mxu0
    %v238 = vadd.f32 0.0, %v237
    %v239 = vpop.f32.mrf.mxu0
    %240 = vdwg.mxu0
    %v241 = vrot.slane %v199, 4
    %v242 = vadd.f32 %v199, %v241
    %v243 = vrot.slane %v242, 2
    %v244 = vadd.f32 %v242, %v243
    %v245 = vrot.slane %v244, 1
    %v246 = vadd.f32 %v244, %v245
    %v247 = vrot.slane %v212, 4
    %v248 = vadd.f32 %v212, %v247
    %v249 = vrot.slane %v248, 2
    %v250 = vadd.f32 %v248, %v249
    %v251 = vrot.slane %v250, 1
    %v252 = vadd.f32 %v250, %v251
    %v253 = vrot.slane %v225, 4
    %v254 = vadd.f32 %v225, %v253
    %v255 = vrot.slane %v254, 2
    %v256 = vadd.f32 %v254, %v255
    %v257 = vrot.slane %v256, 1
    %v258 = vadd.f32 %v256, %v257
    %v259 = vrot.slane %v238, 4
    %v260 = vadd.f32 %v238, %v259
    %v261 = vrot.slane %v260, 2
    %v262 = vadd.f32 %v260, %v261
    %v263 = vrot.slane %v262, 1
    %v264 = vadd.f32 %v262, %v263
    %v265 = vadd.f32 %v246, 0.0
    %v266 = vadd.f32 %v252, 0.0
    %v267 = vadd.f32 %v258, 0.0
    %v268 = vadd.f32 %v264, 0.0
    %v269 = vmul.f32 %v199, %v199
    %v270 = vmul.f32 %v212, %v212
    %v271 = vmul.f32 %v225, %v225
    %v272 = vmul.f32 %v238, %v238
    %v273 = vrot.slane %v269, 4
    %v274 = vadd.f32 %v269, %v273
    %v275 = vrot.slane %v274, 2
    %v276 = vadd.f32 %v274, %v275
    %v277 = vrot.slane %v276, 1
    %v278 = vadd.f32 %v276, %v277
    %v279 = vrot.slane %v270, 4
    %v280 = vadd.f32 %v270, %v279
    %v281 = vrot.slane %v280, 2
    %v282 = vadd.f32 %v280, %v281
    %v283 = vrot.slane %v282, 1
    %v284 = vadd.f32 %v282, %v283
    %v285 = vrot.slane %v271, 4
    %v286 = vadd.f32 %v271, %v285
    %v287 = vrot.slane %v286, 2
    %v288 = vadd.f32 %v286, %v287
    %v289 = vrot.slane %v288, 1
    %v290 = vadd.f32 %v288, %v289
    %v291 = vrot.slane %v272, 4
    %v292 = vadd.f32 %v272, %v291
    %v293 = vrot.slane %v292, 2
    %v294 = vadd.f32 %v292, %v293
    %v295 = vrot.slane %v294, 1
    %v296 = vadd.f32 %v294, %v295
    %v297 = vadd.f32 %v278, 0.0
    %v298 = vadd.f32 %v284, 0.0
    %v299 = vadd.f32 %v290, 0.0
    %v300 = vadd.f32 %v296, 0.0
    %v301 = vmul.f32 %v265, 0.125
    %v302 = vmul.f32 %v266, 0.125
    %v303 = vmul.f32 %v267, 0.125
    %v304 = vmul.f32 %v268, 0.125
    %v305 = vmul.f32 %v297, 0.125
    %v306 = vmul.f32 %v298, 0.125
    %v307 = vmul.f32 %v299, 0.125
    %v308 = vmul.f32 %v300, 0.125
    %v309 = vmul.f32 %v301, %v301
    %v310 = vmul.f32 %v302, %v302
    %v311 = vmul.f32 %v303, %v303
    %v312 = vmul.f32 %v304, %v304
    %v313 = vsub.f32 %v305, %v309
    %v314 = vsub.f32 %v306, %v310
    %v315 = vsub.f32 %v307, %v311
    %v316 = vsub.f32 %v308, %v312
    %v317 = vmax.f32 %v313, 0.0
    %v318 = vmax.f32 %v314, 0.0
    %v319 = vmax.f32 %v315, 0.0
    %v320 = vmax.f32 %v316, 0.0
    %v321 = vld [vmem:[#allocation7] sm:$0xf]
    %v322 = vadd.f32 %v317, 1e-05
    %v323 = vadd.f32 %v318, 1e-05
    %v324 = vadd.f32 %v319, 1e-05
    %v325 = vadd.f32 %v320, 1e-05
    %v326 = vrsqrt.pop %v322
    %v327 = vmul.f32 %v326, %v322
    %v328 = vmul.f32 %v327, %v326
    %v329 = vmul.f32 0.5, %v328
    %v330 = vsub.f32 1.5, %v329
    %v331 = vmul.f32 %v326, %v330
    %vm332 = vweird.f32 %v322
    %vm333 = vweird.f32 %v326
    %vm334 = vmor %vm332, %vm333
    %v335 = vsel %vm334, %v326, %v331
    %v336 = vrsqrt.pop %v323
    %v337 = vmul.f32 %v336, %v323
    %v338 = vmul.f32 %v337, %v336
    %v339 = vmul.f32 0.5, %v338
    %v340 = vsub.f32 1.5, %v339
    %v341 = vmul.f32 %v336, %v340
    %vm342 = vweird.f32 %v323
    %vm343 = vweird.f32 %v336
    %vm344 = vmor %vm342, %vm343
    %v345 = vsel %vm344, %v336, %v341
    %v346 = vrsqrt.pop %v324
    %v347 = vmul.f32 %v346, %v324
    %v348 = vmul.f32 %v347, %v346
    %v349 = vmul.f32 0.5, %v348
    %v350 = vsub.f32 1.5, %v349
    %v351 = vmul.f32 %v346, %v350
    %vm352 = vweird.f32 %v324
    %vm353 = vweird.f32 %v346
    %vm354 = vmor %vm352, %vm353
    %v355 = vsel %vm354, %v346, %v351
    %v356 = vrsqrt.pop %v325
    %v357 = vmul.f32 %v356, %v325
    %v358 = vmul.f32 %v357, %v356
    %v359 = vmul.f32 0.5, %v358
    %v360 = vsub.f32 1.5, %v359
    %v361 = vmul.f32 %v356, %v360
    %vm362 = vweird.f32 %v325
    %vm363 = vweird.f32 %v356
    %vm364 = vmor %vm362, %vm363
    %v365 = vsel %vm364, %v356, %v361
    %v370 = vrot.slane %v345, 7
    %v371 = vrot.slane %v355, 6
    %v372 = vrot.slane %v365, 5
    %vm373 = vcmask 1040384
    %v374 = vsel %vm373, %v335, %v370
    %vm375 = vcmask 1042434
    %v376 = vsel %vm375, %v371, %v372
    %vm377 = vcmask 1041408
    %v378 = vsel %vm377, %v374, %v376
    %v380 = vmul.f32 %v321, %v378
    %v381 = vld [vmem:[#allocation8] sm:$0xf]
    %v383 = vperm.slane %v380, 0
    %v384 = vperm.slane %v380, 1
    %v385 = vperm.slane %v380, 2
    %v386 = vperm.slane %v380, 3
    %v391 = vmul.f32 %v301, %v383
    %v392 = vmul.f32 %v302, %v384
    %v393 = vmul.f32 %v303, %v385
    %v394 = vmul.f32 %v304, %v386
    %v399 = vrot.slane %v392, 7
    %v400 = vrot.slane %v393, 6
    %v401 = vrot.slane %v394, 5
    %v402 = vsel %vm373, %v391, %v399
    %v403 = vsel %vm375, %v400, %v401
    %v404 = vsel %vm377, %v402, %v403
    %v406 = vsub.f32 %v381, %v404
    %v407 = vmul.f32 %v199, %v383
    %v408 = vmul.f32 %v212, %v384
    %v409 = vmul.f32 %v225, %v385
    %v410 = vmul.f32 %v238, %v386
    %v412 = vperm.slane %v406, 0
    %v413 = vperm.slane %v406, 1
    %v414 = vperm.slane %v406, 2
    %v415 = vperm.slane %v406, 3
    %v420 = vadd.f32 %v407, %v412
    %v421 = vadd.f32 %v408, %v413
    %v422 = vadd.f32 %v409, %v414
    %v423 = vadd.f32 %v410, %v415
    %v424 = vmax.f32 %v420, 0.0
    %v425 = vmax.f32 %v421, 0.0
    %v426 = vmax.f32 %v422, 0.0
    %v427 = vmax.f32 %v423, 0.0
    %v428 = vpack.c.bf16 %v424, %v424
    %v429 = vpack.c.bf16 %v425, %v425
    %v430 = vpack.c.bf16 %v426, %v426
    %v431 = vpack.c.bf16 %v427, %v427
    %v432 = vld [vmem:[#allocation10] sm:$0xff]
    %v433 = vld [vmem:[#allocation10 + $0x8] sm:$0xff]
    %v434 = vld [vmem:[#allocation10 + $0x10] sm:$0xff]
    %v435 = vld [vmem:[#allocation10 + $0x18] sm:$0xff]
    %v436 = vld [vmem:[#allocation10 + $0x20] sm:$0xff]
    %v437 = vld [vmem:[#allocation10 + $0x28] sm:$0xff]
    %v438 = vld [vmem:[#allocation10 + $0x30] sm:$0xff]
    %v439 = vld [vmem:[#allocation10 + $0x38] sm:$0xff]
    %v440 = vld [vmem:[#allocation10 + $0x40] sm:$0xff]
    %v441 = vld [vmem:[#allocation10 + $0x48] sm:$0xff]
    %v442 = vld [vmem:[#allocation10 + $0x50] sm:$0xff]
    %v443 = vld [vmem:[#allocation10 + $0x58] sm:$0xff]
    %v444 = vld [vmem:[#allocation10 + $0x60] sm:$0xff]
    %v445 = vld [vmem:[#allocation10 + $0x68] sm:$0xff]
    %v446 = vld [vmem:[#allocation10 + $0x70] sm:$0xff]
    %v447 = vld [vmem:[#allocation10 + $0x78] sm:$0xff]
    %v448 = vld [vmem:[#allocation10 + $0x80] sm:$0xff]
    %v449 = vld [vmem:[#allocation10 + $0x88] sm:$0xff]
    %v450 = vld [vmem:[#allocation10 + $0x90] sm:$0xff]
    %v451 = vld [vmem:[#allocation10 + $0x98] sm:$0xff]
    %v452 = vld [vmem:[#allocation10 + $0xa0] sm:$0xff]
    %v453 = vld [vmem:[#allocation10 + $0xa8] sm:$0xff]
    %v454 = vld [vmem:[#allocation10 + $0xb0] sm:$0xff]
    %v455 = vld [vmem:[#allocation10 + $0xb8] sm:$0xff]
    %v456 = vld [vmem:[#allocation10 + $0xc0] sm:$0xff]
    %v457 = vld [vmem:[#allocation10 + $0xc8] sm:$0xff]
    %v458 = vld [vmem:[#allocation10 + $0xd0] sm:$0xff]
    %v459 = vld [vmem:[#allocation10 + $0xd8] sm:$0xff]
    %v460 = vld [vmem:[#allocation10 + $0xe0] sm:$0xff]
    %v461 = vld [vmem:[#allocation10 + $0xe8] sm:$0xff]
    %v462 = vld [vmem:[#allocation10 + $0xf0] sm:$0xff]
    %v463 = vld [vmem:[#allocation10 + $0xf8] sm:$0xff]
    %v464 = vld [vmem:[#allocation10 + $0x100] sm:$0xff]
    %v465 = vld [vmem:[#allocation10 + $0x108] sm:$0xff]
    %v466 = vld [vmem:[#allocation10 + $0x110] sm:$0xff]
    %v467 = vld [vmem:[#allocation10 + $0x118] sm:$0xff]
    %v468 = vld [vmem:[#allocation10 + $0x120] sm:$0xff]
    %v469 = vld [vmem:[#allocation10 + $0x128] sm:$0xff]
    %v470 = vld [vmem:[#allocation10 + $0x130] sm:$0xff]
    %v471 = vld [vmem:[#allocation10 + $0x138] sm:$0xff]
    %v472 = vld [vmem:[#allocation10 + $0x140] sm:$0xff]
    %v473 = vld [vmem:[#allocation10 + $0x148] sm:$0xff]
    %v474 = vld [vmem:[#allocation10 + $0x150] sm:$0xff]
    %v475 = vld [vmem:[#allocation10 + $0x158] sm:$0xff]
    %v476 = vld [vmem:[#allocation10 + $0x160] sm:$0xff]
    %v477 = vld [vmem:[#allocation10 + $0x168] sm:$0xff]
    %v478 = vld [vmem:[#allocation10 + $0x170] sm:$0xff]
    %v479 = vld [vmem:[#allocation10 + $0x178] sm:$0xff]
    %v480 = vld [vmem:[#allocation10 + $0x180] sm:$0xff]
    %v481 = vld [vmem:[#allocation10 + $0x188] sm:$0xff]
    %v482 = vld [vmem:[#allocation10 + $0x190] sm:$0xff]
    %v483 = vld [vmem:[#allocation10 + $0x198] sm:$0xff]
    %v484 = vld [vmem:[#allocation10 + $0x1a0] sm:$0xff]
    %v485 = vld [vmem:[#allocation10 + $0x1a8] sm:$0xff]
    %v486 = vld [vmem:[#allocation10 + $0x1b0] sm:$0xff]
    %v487 = vld [vmem:[#allocation10 + $0x1b8] sm:$0xff]
    %v488 = vld [vmem:[#allocation10 + $0x1c0] sm:$0xff]
    %v489 = vld [vmem:[#allocation10 + $0x1c8] sm:$0xff]
    %v490 = vld [vmem:[#allocation10 + $0x1d0] sm:$0xff]
    %v491 = vld [vmem:[#allocation10 + $0x1d8] sm:$0xff]
    %v492 = vld [vmem:[#allocation10 + $0x1e0] sm:$0xff]
    %v493 = vld [vmem:[#allocation10 + $0x1e8] sm:$0xff]
    %v494 = vld [vmem:[#allocation10 + $0x1f0] sm:$0xff]
    %v495 = vld [vmem:[#allocation10 + $0x1f8] sm:$0xff]
    %v496 = vld [vmem:[#allocation10 + $0x200] sm:$0xff]
    %v497 = vld [vmem:[#allocation10 + $0x208] sm:$0xff]
    %v498 = vld [vmem:[#allocation10 + $0x210] sm:$0xff]
    %v499 = vld [vmem:[#allocation10 + $0x218] sm:$0xff]
    %v500 = vld [vmem:[#allocation10 + $0x220] sm:$0xff]
    %v501 = vld [vmem:[#allocation10 + $0x228] sm:$0xff]
    %v502 = vld [vmem:[#allocation10 + $0x230] sm:$0xff]
    %v503 = vld [vmem:[#allocation10 + $0x238] sm:$0xff]
    %v504 = vld [vmem:[#allocation10 + $0x240] sm:$0xff]
    %v505 = vld [vmem:[#allocation10 + $0x248] sm:$0xff]
    %v506 = vld [vmem:[#allocation10 + $0x250] sm:$0xff]
    %v507 = vld [vmem:[#allocation10 + $0x258] sm:$0xff]
    %v508 = vld [vmem:[#allocation10 + $0x260] sm:$0xff]
    %v509 = vld [vmem:[#allocation10 + $0x268] sm:$0xff]
    %v510 = vld [vmem:[#allocation10 + $0x270] sm:$0xff]
    %v511 = vld [vmem:[#allocation10 + $0x278] sm:$0xff]
    %v512 = vld [vmem:[#allocation10 + $0x280] sm:$0xff]
    %v513 = vld [vmem:[#allocation10 + $0x288] sm:$0xff]
    %v514 = vld [vmem:[#allocation10 + $0x290] sm:$0xff]
    %v515 = vld [vmem:[#allocation10 + $0x298] sm:$0xff]
    %v516 = vld [vmem:[#allocation10 + $0x2a0] sm:$0xff]
    %v517 = vld [vmem:[#allocation10 + $0x2a8] sm:$0xff]
    %v518 = vld [vmem:[#allocation10 + $0x2b0] sm:$0xff]
    %v519 = vld [vmem:[#allocation10 + $0x2b8] sm:$0xff]
    %v520 = vld [vmem:[#allocation10 + $0x2c0] sm:$0xff]
    %v521 = vld [vmem:[#allocation10 + $0x2c8] sm:$0xff]
    %v522 = vld [vmem:[#allocation10 + $0x2d0] sm:$0xff]
    %v523 = vld [vmem:[#allocation10 + $0x2d8] sm:$0xff]
    %v524 = vld [vmem:[#allocation10 + $0x2e0] sm:$0xff]
    %v525 = vld [vmem:[#allocation10 + $0x2e8] sm:$0xff]
    %v526 = vld [vmem:[#allocation10 + $0x2f0] sm:$0xff]
    %v527 = vld [vmem:[#allocation10 + $0x2f8] sm:$0xff]
    %v528 = vld [vmem:[#allocation10 + $0x300] sm:$0xff]
    %v529 = vld [vmem:[#allocation10 + $0x308] sm:$0xff]
    %v530 = vld [vmem:[#allocation10 + $0x310] sm:$0xff]
    %v531 = vld [vmem:[#allocation10 + $0x318] sm:$0xff]
    %v532 = vld [vmem:[#allocation10 + $0x320] sm:$0xff]
    %v533 = vld [vmem:[#allocation10 + $0x328] sm:$0xff]
    %v534 = vld [vmem:[#allocation10 + $0x330] sm:$0xff]
    %v535 = vld [vmem:[#allocation10 + $0x338] sm:$0xff]
    %v536 = vld [vmem:[#allocation10 + $0x340] sm:$0xff]
    %v537 = vld [vmem:[#allocation10 + $0x348] sm:$0xff]
    %v538 = vld [vmem:[#allocation10 + $0x350] sm:$0xff]
    %v539 = vld [vmem:[#allocation10 + $0x358] sm:$0xff]
    %v540 = vld [vmem:[#allocation10 + $0x360] sm:$0xff]
    %v541 = vld [vmem:[#allocation10 + $0x368] sm:$0xff]
    %v542 = vld [vmem:[#allocation10 + $0x370] sm:$0xff]
    %v543 = vld [vmem:[#allocation10 + $0x378] sm:$0xff]
    %v544 = vld [vmem:[#allocation10 + $0x380] sm:$0xff]
    %v545 = vld [vmem:[#allocation10 + $0x388] sm:$0xff]
    %v546 = vld [vmem:[#allocation10 + $0x390] sm:$0xff]
    %v547 = vld [vmem:[#allocation10 + $0x398] sm:$0xff]
    %v548 = vld [vmem:[#allocation10 + $0x3a0] sm:$0xff]
    %v549 = vld [vmem:[#allocation10 + $0x3a8] sm:$0xff]
    %v550 = vld [vmem:[#allocation10 + $0x3b0] sm:$0xff]
    %v551 = vld [vmem:[#allocation10 + $0x3b8] sm:$0xff]
    %v552 = vld [vmem:[#allocation10 + $0x3c0] sm:$0xff]
    %v553 = vld [vmem:[#allocation10 + $0x3c8] sm:$0xff]
    %v554 = vld [vmem:[#allocation10 + $0x3d0] sm:$0xff]
    %v555 = vld [vmem:[#allocation10 + $0x3d8] sm:$0xff]
    %v556 = vld [vmem:[#allocation10 + $0x3e0] sm:$0xff]
    %v557 = vld [vmem:[#allocation10 + $0x3e8] sm:$0xff]
    %v558 = vld [vmem:[#allocation10 + $0x3f0] sm:$0xff]
    %v559 = vld [vmem:[#allocation10 + $0x3f8] sm:$0xff]
    %v688 = vunpack.c.l.b16 %v432
    %v689 = vunpack.c.h.b16 %v432
    %v690 = vunpack.c.l.b16 %v433
    %v691 = vunpack.c.h.b16 %v433
    %v692 = vunpack.c.l.b16 %v434
    %v693 = vunpack.c.h.b16 %v434
    %v694 = vunpack.c.l.b16 %v435
    %v695 = vunpack.c.h.b16 %v435
    %v696 = vunpack.c.l.b16 %v436
    %v697 = vunpack.c.h.b16 %v436
    %v698 = vunpack.c.l.b16 %v437
    %v699 = vunpack.c.h.b16 %v437
    %v700 = vunpack.c.l.b16 %v438
    %v701 = vunpack.c.h.b16 %v438
    %v702 = vunpack.c.l.b16 %v439
    %v703 = vunpack.c.h.b16 %v439
    %v704 = vunpack.c.l.b16 %v440
    %v705 = vunpack.c.h.b16 %v440
    %v706 = vunpack.c.l.b16 %v441
    %v707 = vunpack.c.h.b16 %v441
    %v708 = vunpack.c.l.b16 %v442
    %v709 = vunpack.c.h.b16 %v442
    %v710 = vunpack.c.l.b16 %v443
    %v711 = vunpack.c.h.b16 %v443
    %v712 = vunpack.c.l.b16 %v444
    %v713 = vunpack.c.h.b16 %v444
    %v714 = vunpack.c.l.b16 %v445
    %v715 = vunpack.c.h.b16 %v445
    %v716 = vunpack.c.l.b16 %v446
    %v717 = vunpack.c.h.b16 %v446
    %v718 = vunpack.c.l.b16 %v447
    %v719 = vunpack.c.h.b16 %v447
    %v720 = vunpack.c.l.b16 %v448
    %v721 = vunpack.c.h.b16 %v448
    %v722 = vunpack.c.l.b16 %v449
    %v723 = vunpack.c.h.b16 %v449
    %v724 = vunpack.c.l.b16 %v450
    %v725 = vunpack.c.h.b16 %v450
    %v726 = vunpack.c.l.b16 %v451
    %v727 = vunpack.c.h.b16 %v451
    %v728 = vunpack.c.l.b16 %v452
    %v729 = vunpack.c.h.b16 %v452
    %v730 = vunpack.c.l.b16 %v453
    %v731 = vunpack.c.h.b16 %v453
    %v732 = vunpack.c.l.b16 %v454
    %v733 = vunpack.c.h.b16 %v454
    %v734 = vunpack.c.l.b16 %v455
    %v735 = vunpack.c.h.b16 %v455
    %v736 = vunpack.c.l.b16 %v456
    %v737 = vunpack.c.h.b16 %v456
    %v738 = vunpack.c.l.b16 %v457
    %v739 = vunpack.c.h.b16 %v457
    %v740 = vunpack.c.l.b16 %v458
    %v741 = vunpack.c.h.b16 %v458
    %v742 = vunpack.c.l.b16 %v459
    %v743 = vunpack.c.h.b16 %v459
    %v744 = vunpack.c.l.b16 %v460
    %v745 = vunpack.c.h.b16 %v460
    %v746 = vunpack.c.l.b16 %v461
    %v747 = vunpack.c.h.b16 %v461
    %v748 = vunpack.c.l.b16 %v462
    %v749 = vunpack.c.h.b16 %v462
    %v750 = vunpack.c.l.b16 %v463
    %v751 = vunpack.c.h.b16 %v463
    %v752 = vunpack.c.l.b16 %v464
    %v753 = vunpack.c.h.b16 %v464
    %v754 = vunpack.c.l.b16 %v465
    %v755 = vunpack.c.h.b16 %v465
    %v756 = vunpack.c.l.b16 %v466
    %v757 = vunpack.c.h.b16 %v466
    %v758 = vunpack.c.l.b16 %v467
    %v759 = vunpack.c.h.b16 %v467
    %v760 = vunpack.c.l.b16 %v468
    %v761 = vunpack.c.h.b16 %v468
    %v762 = vunpack.c.l.b16 %v469
    %v763 = vunpack.c.h.b16 %v469
    %v764 = vunpack.c.l.b16 %v470
    %v765 = vunpack.c.h.b16 %v470
    %v766 = vunpack.c.l.b16 %v471
    %v767 = vunpack.c.h.b16 %v471
    %v768 = vunpack.c.l.b16 %v472
    %v769 = vunpack.c.h.b16 %v472
    %v770 = vunpack.c.l.b16 %v473
    %v771 = vunpack.c.h.b16 %v473
    %v772 = vunpack.c.l.b16 %v474
    %v773 = vunpack.c.h.b16 %v474
    %v774 = vunpack.c.l.b16 %v475
    %v775 = vunpack.c.h.b16 %v475
    %v776 = vunpack.c.l.b16 %v476
    %v777 = vunpack.c.h.b16 %v476
    %v778 = vunpack.c.l.b16 %v477
    %v779 = vunpack.c.h.b16 %v477
    %v780 = vunpack.c.l.b16 %v478
    %v781 = vunpack.c.h.b16 %v478
    %v782 = vunpack.c.l.b16 %v479
    %v783 = vunpack.c.h.b16 %v479
    %v784 = vunpack.c.l.b16 %v480
    %v785 = vunpack.c.h.b16 %v480
    %v786 = vunpack.c.l.b16 %v481
    %v787 = vunpack.c.h.b16 %v481
    %v788 = vunpack.c.l.b16 %v482
    %v789 = vunpack.c.h.b16 %v482
    %v790 = vunpack.c.l.b16 %v483
    %v791 = vunpack.c.h.b16 %v483
    %v792 = vunpack.c.l.b16 %v484
    %v793 = vunpack.c.h.b16 %v484
    %v794 = vunpack.c.l.b16 %v485
    %v795 = vunpack.c.h.b16 %v485
    %v796 = vunpack.c.l.b16 %v486
    %v797 = vunpack.c.h.b16 %v486
    %v798 = vunpack.c.l.b16 %v487
    %v799 = vunpack.c.h.b16 %v487
    %v800 = vunpack.c.l.b16 %v488
    %v801 = vunpack.c.h.b16 %v488
    %v802 = vunpack.c.l.b16 %v489
    %v803 = vunpack.c.h.b16 %v489
    %v804 = vunpack.c.l.b16 %v490
    %v805 = vunpack.c.h.b16 %v490
    %v806 = vunpack.c.l.b16 %v491
    %v807 = vunpack.c.h.b16 %v491
    %v808 = vunpack.c.l.b16 %v492
    %v809 = vunpack.c.h.b16 %v492
    %v810 = vunpack.c.l.b16 %v493
    %v811 = vunpack.c.h.b16 %v493
    %v812 = vunpack.c.l.b16 %v494
    %v813 = vunpack.c.h.b16 %v494
    %v814 = vunpack.c.l.b16 %v495
    %v815 = vunpack.c.h.b16 %v495
    %v816 = vunpack.c.l.b16 %v496
    %v817 = vunpack.c.h.b16 %v496
    %v818 = vunpack.c.l.b16 %v497
    %v819 = vunpack.c.h.b16 %v497
    %v820 = vunpack.c.l.b16 %v498
    %v821 = vunpack.c.h.b16 %v498
    %v822 = vunpack.c.l.b16 %v499
    %v823 = vunpack.c.h.b16 %v499
    %v824 = vunpack.c.l.b16 %v500
    %v825 = vunpack.c.h.b16 %v500
    %v826 = vunpack.c.l.b16 %v501
    %v827 = vunpack.c.h.b16 %v501
    %v828 = vunpack.c.l.b16 %v502
    %v829 = vunpack.c.h.b16 %v502
    %v830 = vunpack.c.l.b16 %v503
    %v831 = vunpack.c.h.b16 %v503
    %v832 = vunpack.c.l.b16 %v504
    %v833 = vunpack.c.h.b16 %v504
    %v834 = vunpack.c.l.b16 %v505
    %v835 = vunpack.c.h.b16 %v505
    %v836 = vunpack.c.l.b16 %v506
    %v837 = vunpack.c.h.b16 %v506
    %v838 = vunpack.c.l.b16 %v507
    %v839 = vunpack.c.h.b16 %v507
    %v840 = vunpack.c.l.b16 %v508
    %v841 = vunpack.c.h.b16 %v508
    %v842 = vunpack.c.l.b16 %v509
    %v843 = vunpack.c.h.b16 %v509
    %v844 = vunpack.c.l.b16 %v510
    %v845 = vunpack.c.h.b16 %v510
    %v846 = vunpack.c.l.b16 %v511
    %v847 = vunpack.c.h.b16 %v511
    %v848 = vunpack.c.l.b16 %v512
    %v849 = vunpack.c.h.b16 %v512
    %v850 = vunpack.c.l.b16 %v513
    %v851 = vunpack.c.h.b16 %v513
    %v852 = vunpack.c.l.b16 %v514
    %v853 = vunpack.c.h.b16 %v514
    %v854 = vunpack.c.l.b16 %v515
    %v855 = vunpack.c.h.b16 %v515
    %v856 = vunpack.c.l.b16 %v516
    %v857 = vunpack.c.h.b16 %v516
    %v858 = vunpack.c.l.b16 %v517
    %v859 = vunpack.c.h.b16 %v517
    %v860 = vunpack.c.l.b16 %v518
    %v861 = vunpack.c.h.b16 %v518
    %v862 = vunpack.c.l.b16 %v519
    %v863 = vunpack.c.h.b16 %v519
    %v864 = vunpack.c.l.b16 %v520
    %v865 = vunpack.c.h.b16 %v520
    %v866 = vunpack.c.l.b16 %v521
    %v867 = vunpack.c.h.b16 %v521
    %v868 = vunpack.c.l.b16 %v522
    %v869 = vunpack.c.h.b16 %v522
    %v870 = vunpack.c.l.b16 %v523
    %v871 = vunpack.c.h.b16 %v523
    %v872 = vunpack.c.l.b16 %v524
    %v873 = vunpack.c.h.b16 %v524
    %v874 = vunpack.c.l.b16 %v525
    %v875 = vunpack.c.h.b16 %v525
    %v876 = vunpack.c.l.b16 %v526
    %v877 = vunpack.c.h.b16 %v526
    %v878 = vunpack.c.l.b16 %v527
    %v879 = vunpack.c.h.b16 %v527
    %v880 = vunpack.c.l.b16 %v528
    %v881 = vunpack.c.h.b16 %v528
    %v882 = vunpack.c.l.b16 %v529
    %v883 = vunpack.c.h.b16 %v529
    %v884 = vunpack.c.l.b16 %v530
    %v885 = vunpack.c.h.b16 %v530
    %v886 = vunpack.c.l.b16 %v531
    %v887 = vunpack.c.h.b16 %v531
    %v888 = vunpack.c.l.b16 %v532
    %v889 = vunpack.c.h.b16 %v532
    %v890 = vunpack.c.l.b16 %v533
    %v891 = vunpack.c.h.b16 %v533
    %v892 = vunpack.c.l.b16 %v534
    %v893 = vunpack.c.h.b16 %v534
    %v894 = vunpack.c.l.b16 %v535
    %v895 = vunpack.c.h.b16 %v535
    %v896 = vunpack.c.l.b16 %v536
    %v897 = vunpack.c.h.b16 %v536
    %v898 = vunpack.c.l.b16 %v537
    %v899 = vunpack.c.h.b16 %v537
    %v900 = vunpack.c.l.b16 %v538
    %v901 = vunpack.c.h.b16 %v538
    %v902 = vunpack.c.l.b16 %v539
    %v903 = vunpack.c.h.b16 %v539
    %v904 = vunpack.c.l.b16 %v540
    %v905 = vunpack.c.h.b16 %v540
    %v906 = vunpack.c.l.b16 %v541
    %v907 = vunpack.c.h.b16 %v541
    %v908 = vunpack.c.l.b16 %v542
    %v909 = vunpack.c.h.b16 %v542
    %v910 = vunpack.c.l.b16 %v543
    %v911 = vunpack.c.h.b16 %v543
    %v912 = vunpack.c.l.b16 %v544
    %v913 = vunpack.c.h.b16 %v544
    %v914 = vunpack.c.l.b16 %v545
    %v915 = vunpack.c.h.b16 %v545
    %v916 = vunpack.c.l.b16 %v546
    %v917 = vunpack.c.h.b16 %v546
    %v918 = vunpack.c.l.b16 %v547
    %v919 = vunpack.c.h.b16 %v547
    %v920 = vunpack.c.l.b16 %v548
    %v921 = vunpack.c.h.b16 %v548
    %v922 = vunpack.c.l.b16 %v549
    %v923 = vunpack.c.h.b16 %v549
    %v924 = vunpack.c.l.b16 %v550
    %v925 = vunpack.c.h.b16 %v550
    %v926 = vunpack.c.l.b16 %v551
    %v927 = vunpack.c.h.b16 %v551
    %v928 = vunpack.c.l.b16 %v552
    %v929 = vunpack.c.h.b16 %v552
    %v930 = vunpack.c.l.b16 %v553
    %v931 = vunpack.c.h.b16 %v553
    %v932 = vunpack.c.l.b16 %v554
    %v933 = vunpack.c.h.b16 %v554
    %v934 = vunpack.c.l.b16 %v555
    %v935 = vunpack.c.h.b16 %v555
    %v936 = vunpack.c.l.b16 %v556
    %v937 = vunpack.c.h.b16 %v556
    %v938 = vunpack.c.l.b16 %v557
    %v939 = vunpack.c.h.b16 %v557
    %v940 = vunpack.c.l.b16 %v558
    %v941 = vunpack.c.h.b16 %v558
    %v942 = vunpack.c.l.b16 %v559
    %v943 = vunpack.c.h.b16 %v559
    %v944 = vpack.c.b16 %v692, %v688
    %v945 = vpack.c.b16 %v693, %v689
    %v946 = vpack.c.b16 %v694, %v690
    %v947 = vpack.c.b16 %v695, %v691
    %v948 = vpack.c.b16 %v700, %v696
    %v949 = vpack.c.b16 %v701, %v697
    %v950 = vpack.c.b16 %v702, %v698
    %v951 = vpack.c.b16 %v703, %v699
    %v952 = vpack.c.b16 %v708, %v704
    %v953 = vpack.c.b16 %v709, %v705
    %v954 = vpack.c.b16 %v710, %v706
    %v955 = vpack.c.b16 %v711, %v707
    %v956 = vpack.c.b16 %v716, %v712
    %v957 = vpack.c.b16 %v717, %v713
    %v958 = vpack.c.b16 %v718, %v714
    %v959 = vpack.c.b16 %v719, %v715
    %v960 = vpack.c.b16 %v724, %v720
    %v961 = vpack.c.b16 %v725, %v721
    %v962 = vpack.c.b16 %v726, %v722
    %v963 = vpack.c.b16 %v727, %v723
    %v964 = vpack.c.b16 %v732, %v728
    %v965 = vpack.c.b16 %v733, %v729
    %v966 = vpack.c.b16 %v734, %v730
    %v967 = vpack.c.b16 %v735, %v731
    %v968 = vpack.c.b16 %v740, %v736
    %v969 = vpack.c.b16 %v741, %v737
    %v970 = vpack.c.b16 %v742, %v738
    %v971 = vpack.c.b16 %v743, %v739
    %v972 = vpack.c.b16 %v748, %v744
    %v973 = vpack.c.b16 %v749, %v745
    %v974 = vpack.c.b16 %v750, %v746
    %v975 = vpack.c.b16 %v751, %v747
    %v976 = vpack.c.b16 %v756, %v752
    %v977 = vpack.c.b16 %v757, %v753
    %v978 = vpack.c.b16 %v758, %v754
    %v979 = vpack.c.b16 %v759, %v755
    %v980 = vpack.c.b16 %v764, %v760
    %v981 = vpack.c.b16 %v765, %v761
    %v982 = vpack.c.b16 %v766, %v762
    %v983 = vpack.c.b16 %v767, %v763
    %v984 = vpack.c.b16 %v772, %v768
    %v985 = vpack.c.b16 %v773, %v769
    %v986 = vpack.c.b16 %v774, %v770
    %v987 = vpack.c.b16 %v775, %v771
    %v988 = vpack.c.b16 %v780, %v776
    %v989 = vpack.c.b16 %v781, %v777
    %v990 = vpack.c.b16 %v782, %v778
    %v991 = vpack.c.b16 %v783, %v779
    %v992 = vpack.c.b16 %v788, %v784
    %v993 = vpack.c.b16 %v789, %v785
    %v994 = vpack.c.b16 %v790, %v786
    %v995 = vpack.c.b16 %v791, %v787
    %v996 = vpack.c.b16 %v796, %v792
    %v997 = vpack.c.b16 %v797, %v793
    %v998 = vpack.c.b16 %v798, %v794
    %v999 = vpack.c.b16 %v799, %v795
    %v1000 = vpack.c.b16 %v804, %v800
    %v1001 = vpack.c.b16 %v805, %v801
    %v1002 = vpack.c.b16 %v806, %v802
    %v1003 = vpack.c.b16 %v807, %v803
    %v1004 = vpack.c.b16 %v812, %v808
    %v1005 = vpack.c.b16 %v813, %v809
    %v1006 = vpack.c.b16 %v814, %v810
    %v1007 = vpack.c.b16 %v815, %v811
    %v1008 = vpack.c.b16 %v820, %v816
    %v1009 = vpack.c.b16 %v821, %v817
    %v1010 = vpack.c.b16 %v822, %v818
    %v1011 = vpack.c.b16 %v823, %v819
    %v1012 = vpack.c.b16 %v828, %v824
    %v1013 = vpack.c.b16 %v829, %v825
    %v1014 = vpack.c.b16 %v830, %v826
    %v1015 = vpack.c.b16 %v831, %v827
    %v1016 = vpack.c.b16 %v836, %v832
    %v1017 = vpack.c.b16 %v837, %v833
    %v1018 = vpack.c.b16 %v838, %v834
    %v1019 = vpack.c.b16 %v839, %v835
    %v1020 = vpack.c.b16 %v844, %v840
    %v1021 = vpack.c.b16 %v845, %v841
    %v1022 = vpack.c.b16 %v846, %v842
    %v1023 = vpack.c.b16 %v847, %v843
    %v1024 = vpack.c.b16 %v852, %v848
    %v1025 = vpack.c.b16 %v853, %v849
    %v1026 = vpack.c.b16 %v854, %v850
    %v1027 = vpack.c.b16 %v855, %v851
    %v1028 = vpack.c.b16 %v860, %v856
    %v1029 = vpack.c.b16 %v861, %v857
    %v1030 = vpack.c.b16 %v862, %v858
    %v1031 = vpack.c.b16 %v863, %v859
    %v1032 = vpack.c.b16 %v868, %v864
    %v1033 = vpack.c.b16 %v869, %v865
    %v1034 = vpack.c.b16 %v870, %v866
    %v1035 = vpack.c.b16 %v871, %v867
    %v1036 = vpack.c.b16 %v876, %v872
    %v1037 = vpack.c.b16 %v877, %v873
    %v1038 = vpack.c.b16 %v878, %v874
    %v1039 = vpack.c.b16 %v879, %v875
    %v1040 = vpack.c.b16 %v884, %v880
    %v1041 = vpack.c.b16 %v885, %v881
    %v1042 = vpack.c.b16 %v886, %v882
    %v1043 = vpack.c.b16 %v887, %v883
    %v1044 = vpack.c.b16 %v892, %v888
    %v1045 = vpack.c.b16 %v893, %v889
    %v1046 = vpack.c.b16 %v894, %v890
    %v1047 = vpack.c.b16 %v895, %v891
    %v1048 = vpack.c.b16 %v900, %v896
    %v1049 = vpack.c.b16 %v901, %v897
    %v1050 = vpack.c.b16 %v902, %v898
    %v1051 = vpack.c.b16 %v903, %v899
    %v1052 = vpack.c.b16 %v908, %v904
    %v1053 = vpack.c.b16 %v909, %v905
    %v1054 = vpack.c.b16 %v910, %v906
    %v1055 = vpack.c.b16 %v911, %v907
    %v1056 = vpack.c.b16 %v916, %v912
    %v1057 = vpack.c.b16 %v917, %v913
    %v1058 = vpack.c.b16 %v918, %v914
    %v1059 = vpack.c.b16 %v919, %v915
    %v1060 = vpack.c.b16 %v924, %v920
    %v1061 = vpack.c.b16 %v925, %v921
    %v1062 = vpack.c.b16 %v926, %v922
    %v1063 = vpack.c.b16 %v927, %v923
    %v1064 = vpack.c.b16 %v932, %v928
    %v1065 = vpack.c.b16 %v933, %v929
    %v1066 = vpack.c.b16 %v934, %v930
    %v1067 = vpack.c.b16 %v935, %v931
    %v1068 = vpack.c.b16 %v940, %v936
    %v1069 = vpack.c.b16 %v941, %v937
    %v1070 = vpack.c.b16 %v942, %v938
    %v1071 = vpack.c.b16 %v943, %v939
    %1200 = vmatpush.bf16.msra.mxu0 %v972
    %1201 = vmatpush.bf16.msra.mxu0 %v968
    %1202 = vmatpush.bf16.msra.mxu0 %v964
    %1203 = vmatpush.bf16.msra.mxu0 %v960
    %1204 = vmatpush.bf16.msra.mxu0 %v956
    %1205 = vmatpush.bf16.msra.mxu0 %v952
    %1206 = vmatpush.bf16.msra.mxu0 %v948
    %1207 = vmatpush.bf16.msra.mxu0 %v944
    %1208 = vmatmul.bf16.gmra.mxu0 %v428
    %v1209 = vpop.f32.mrf.mxu0
    %v1210 = vadd.f32 0.0, %v1209
    %v1211 = vpop.f32.mrf.mxu0
    %1212 = vdwg.mxu0
    %1213 = vmatpush.bf16.msra.mxu0 %v1004
    %1214 = vmatpush.bf16.msra.mxu0 %v1000
    %1215 = vmatpush.bf16.msra.mxu0 %v996
    %1216 = vmatpush.bf16.msra.mxu0 %v992
    %1217 = vmatpush.bf16.msra.mxu0 %v988
    %1218 = vmatpush.bf16.msra.mxu0 %v984
    %1219 = vmatpush.bf16.msra.mxu0 %v980
    %1220 = vmatpush.bf16.msra.mxu0 %v976
    %1221 = vmatmul.bf16.gmra.mxu0 %v429
    %v1222 = vpop.f32.mrf.mxu0
    %v1223 = vadd.f32 %v1210, %v1222
    %v1224 = vpop.f32.mrf.mxu0
    %1225 = vdwg.mxu0
    %1226 = vmatpush.bf16.msra.mxu0 %v1036
    %1227 = vmatpush.bf16.msra.mxu0 %v1032
    %1228 = vmatpush.bf16.msra.mxu0 %v1028
    %1229 = vmatpush.bf16.msra.mxu0 %v1024
    %1230 = vmatpush.bf16.msra.mxu0 %v1020
    %1231 = vmatpush.bf16.msra.mxu0 %v1016
    %1232 = vmatpush.bf16.msra.mxu0 %v1012
    %1233 = vmatpush.bf16.msra.mxu0 %v1008
    %1234 = vmatmul.bf16.gmra.mxu0 %v430
    %v1235 = vpop.f32.mrf.mxu0
    %v1236 = vadd.f32 %v1223, %v1235
    %v1237 = vpop.f32.mrf.mxu0
    %1238 = vdwg.mxu0
    %1239 = vmatpush.bf16.msra.mxu0 %v1068
    %1240 = vmatpush.bf16.msra.mxu0 %v1064
    %1241 = vmatpush.bf16.msra.mxu0 %v1060
    %1242 = vmatpush.bf16.msra.mxu0 %v1056
    %1243 = vmatpush.bf16.msra.mxu0 %v1052
    %1244 = vmatpush.bf16.msra.mxu0 %v1048
    %1245 = vmatpush.bf16.msra.mxu0 %v1044
    %1246 = vmatpush.bf16.msra.mxu0 %v1040
    %1247 = vmatmul.bf16.gmra.mxu0 %v431
    %v1248 = vpop.f32.mrf.mxu0
    %v1249 = vadd.f32 %v1236, %v1248
    %v1250 = vpop.f32.mrf.mxu0
    %1251 = vdwg.mxu0
    %1252 = vmatpush.bf16.msra.mxu0 %v973
    %1253 = vmatpush.bf16.msra.mxu0 %v969
    %1254 = vmatpush.bf16.msra.mxu0 %v965
    %1255 = vmatpush.bf16.msra.mxu0 %v961
    %1256 = vmatpush.bf16.msra.mxu0 %v957
    %1257 = vmatpush.bf16.msra.mxu0 %v953
    %1258 = vmatpush.bf16.msra.mxu0 %v949
    %1259 = vmatpush.bf16.msra.mxu0 %v945
    %1260 = vmatmul.bf16.gmra.mxu0 %v428
    %v1261 = vpop.f32.mrf.mxu0
    %v1262 = vadd.f32 0.0, %v1261
    %v1263 = vpop.f32.mrf.mxu0
    %1264 = vdwg.mxu0
    %1265 = vmatpush.bf16.msra.mxu0 %v1005
    %1266 = vmatpush.bf16.msra.mxu0 %v1001
    %1267 = vmatpush.bf16.msra.mxu0 %v997
    %1268 = vmatpush.bf16.msra.mxu0 %v993
    %1269 = vmatpush.bf16.msra.mxu0 %v989
    %1270 = vmatpush.bf16.msra.mxu0 %v985
    %1271 = vmatpush.bf16.msra.mxu0 %v981
    %1272 = vmatpush.bf16.msra.mxu0 %v977
    %1273 = vmatmul.bf16.gmra.mxu0 %v429
    %v1274 = vpop.f32.mrf.mxu0
    %v1275 = vadd.f32 %v1262, %v1274
    %v1276 = vpop.f32.mrf.mxu0
    %1277 = vdwg.mxu0
    %1278 = vmatpush.bf16.msra.mxu0 %v1037
    %1279 = vmatpush.bf16.msra.mxu0 %v1033
    %1280 = vmatpush.bf16.msra.mxu0 %v1029
    %1281 = vmatpush.bf16.msra.mxu0 %v1025
    %1282 = vmatpush.bf16.msra.mxu0 %v1021
    %1283 = vmatpush.bf16.msra.mxu0 %v1017
    %1284 = vmatpush.bf16.msra.mxu0 %v1013
    %1285 = vmatpush.bf16.msra.mxu0 %v1009
    %1286 = vmatmul.bf16.gmra.mxu0 %v430
    %v1287 = vpop.f32.mrf.mxu0
    %v1288 = vadd.f32 %v1275, %v1287
    %v1289 = vpop.f32.mrf.mxu0
    %1290 = vdwg.mxu0
    %1291 = vmatpush.bf16.msra.mxu0 %v1069
    %1292 = vmatpush.bf16.msra.mxu0 %v1065
    %1293 = vmatpush.bf16.msra.mxu0 %v1061
    %1294 = vmatpush.bf16.msra.mxu0 %v1057
    %1295 = vmatpush.bf16.msra.mxu0 %v1053
    %1296 = vmatpush.bf16.msra.mxu0 %v1049
    %1297 = vmatpush.bf16.msra.mxu0 %v1045
    %1298 = vmatpush.bf16.msra.mxu0 %v1041
    %1299 = vmatmul.bf16.gmra.mxu0 %v431
    %v1300 = vpop.f32.mrf.mxu0
    %v1301 = vadd.f32 %v1288, %v1300
    %v1302 = vpop.f32.mrf.mxu0
    %1303 = vdwg.mxu0
    %1304 = vmatpush.bf16.msra.mxu0 %v974
    %1305 = vmatpush.bf16.msra.mxu0 %v970
    %1306 = vmatpush.bf16.msra.mxu0 %v966
    %1307 = vmatpush.bf16.msra.mxu0 %v962
    %1308 = vmatpush.bf16.msra.mxu0 %v958
    %1309 = vmatpush.bf16.msra.mxu0 %v954
    %1310 = vmatpush.bf16.msra.mxu0 %v950
    %1311 = vmatpush.bf16.msra.mxu0 %v946
    %1312 = vmatmul.bf16.gmra.mxu0 %v428
    %v1313 = vpop.f32.mrf.mxu0
    %v1314 = vadd.f32 0.0, %v1313
    %v1315 = vpop.f32.mrf.mxu0
    %1316 = vdwg.mxu0
    %1317 = vmatpush.bf16.msra.mxu0 %v1006
    %1318 = vmatpush.bf16.msra.mxu0 %v1002
    %1319 = vmatpush.bf16.msra.mxu0 %v998
    %1320 = vmatpush.bf16.msra.mxu0 %v994
    %1321 = vmatpush.bf16.msra.mxu0 %v990
    %1322 = vmatpush.bf16.msra.mxu0 %v986
    %1323 = vmatpush.bf16.msra.mxu0 %v982
    %1324 = vmatpush.bf16.msra.mxu0 %v978
    %1325 = vmatmul.bf16.gmra.mxu0 %v429
    %v1326 = vpop.f32.mrf.mxu0
    %v1327 = vadd.f32 %v1314, %v1326
    %v1328 = vpop.f32.mrf.mxu0
    %1329 = vdwg.mxu0
    %1330 = vmatpush.bf16.msra.mxu0 %v1038
    %1331 = vmatpush.bf16.msra.mxu0 %v1034
    %1332 = vmatpush.bf16.msra.mxu0 %v1030
    %1333 = vmatpush.bf16.msra.mxu0 %v1026
    %1334 = vmatpush.bf16.msra.mxu0 %v1022
    %1335 = vmatpush.bf16.msra.mxu0 %v1018
    %1336 = vmatpush.bf16.msra.mxu0 %v1014
    %1337 = vmatpush.bf16.msra.mxu0 %v1010
    %1338 = vmatmul.bf16.gmra.mxu0 %v430
    %v1339 = vpop.f32.mrf.mxu0
    %v1340 = vadd.f32 %v1327, %v1339
    %v1341 = vpop.f32.mrf.mxu0
    %1342 = vdwg.mxu0
    %1343 = vmatpush.bf16.msra.mxu0 %v1070
    %1344 = vmatpush.bf16.msra.mxu0 %v1066
    %1345 = vmatpush.bf16.msra.mxu0 %v1062
    %1346 = vmatpush.bf16.msra.mxu0 %v1058
    %1347 = vmatpush.bf16.msra.mxu0 %v1054
    %1348 = vmatpush.bf16.msra.mxu0 %v1050
    %1349 = vmatpush.bf16.msra.mxu0 %v1046
    %1350 = vmatpush.bf16.msra.mxu0 %v1042
    %1351 = vmatmul.bf16.gmra.mxu0 %v431
    %v1352 = vpop.f32.mrf.mxu0
    %v1353 = vadd.f32 %v1340, %v1352
    %v1354 = vpop.f32.mrf.mxu0
    %1355 = vdwg.mxu0
    %1356 = vmatpush.bf16.msra.mxu0 %v975
    %1357 = vmatpush.bf16.msra.mxu0 %v971
    %1358 = vmatpush.bf16.msra.mxu0 %v967
    %1359 = vmatpush.bf16.msra.mxu0 %v963
    %1360 = vmatpush.bf16.msra.mxu0 %v959
    %1361 = vmatpush.bf16.msra.mxu0 %v955
    %1362 = vmatpush.bf16.msra.mxu0 %v951
    %1363 = vmatpush.bf16.msra.mxu0 %v947
    %1364 = vmatmul.bf16.gmra.mxu0 %v428
    %v1365 = vpop.f32.mrf.mxu0
    %v1366 = vadd.f32 0.0, %v1365
    %v1367 = vpop.f32.mrf.mxu0
    %1368 = vdwg.mxu0
    %1369 = vmatpush.bf16.msra.mxu0 %v1007
    %1370 = vmatpush.bf16.msra.mxu0 %v1003
    %1371 = vmatpush.bf16.msra.mxu0 %v999
    %1372 = vmatpush.bf16.msra.mxu0 %v995
    %1373 = vmatpush.bf16.msra.mxu0 %v991
    %1374 = vmatpush.bf16.msra.mxu0 %v987
    %1375 = vmatpush.bf16.msra.mxu0 %v983
    %1376 = vmatpush.bf16.msra.mxu0 %v979
    %1377 = vmatmul.bf16.gmra.mxu0 %v429
    %v1378 = vpop.f32.mrf.mxu0
    %v1379 = vadd.f32 %v1366, %v1378
    %v1380 = vpop.f32.mrf.mxu0
    %1381 = vdwg.mxu0
    %1382 = vmatpush.bf16.msra.mxu0 %v1039
    %1383 = vmatpush.bf16.msra.mxu0 %v1035
    %1384 = vmatpush.bf16.msra.mxu0 %v1031
    %1385 = vmatpush.bf16.msra.mxu0 %v1027
    %1386 = vmatpush.bf16.msra.mxu0 %v1023
    %1387 = vmatpush.bf16.msra.mxu0 %v1019
    %1388 = vmatpush.bf16.msra.mxu0 %v1015
    %1389 = vmatpush.bf16.msra.mxu0 %v1011
    %1390 = vmatmul.bf16.gmra.mxu0 %v430
    %v1391 = vpop.f32.mrf.mxu0
    %v1392 = vadd.f32 %v1379, %v1391
    %v1393 = vpop.f32.mrf.mxu0
    %1394 = vdwg.mxu0
    %1395 = vmatpush.bf16.msra.mxu0 %v1071
    %1396 = vmatpush.bf16.msra.mxu0 %v1067
    %1397 = vmatpush.bf16.msra.mxu0 %v1063
    %1398 = vmatpush.bf16.msra.mxu0 %v1059
    %1399 = vmatpush.bf16.msra.mxu0 %v1055
    %1400 = vmatpush.bf16.msra.mxu0 %v1051
    %1401 = vmatpush.bf16.msra.mxu0 %v1047
    %1402 = vmatpush.bf16.msra.mxu0 %v1043
    %1403 = vmatmul.bf16.gmra.mxu0 %v431
    %v1404 = vpop.f32.mrf.mxu0
    %v1405 = vadd.f32 %v1392, %v1404
    %v1406 = vpop.f32.mrf.mxu0
    %1407 = vdwg.mxu0
    %v1408 = vrot.slane %v1249, 4
    %v1409 = vadd.f32 %v1249, %v1408
    %v1410 = vrot.slane %v1409, 2
    %v1411 = vadd.f32 %v1409, %v1410
    %v1412 = vrot.slane %v1411, 1
    %v1413 = vadd.f32 %v1411, %v1412
    %v1414 = vrot.slane %v1301, 4
    %v1415 = vadd.f32 %v1301, %v1414
    %v1416 = vrot.slane %v1415, 2
    %v1417 = vadd.f32 %v1415, %v1416
    %v1418 = vrot.slane %v1417, 1
    %v1419 = vadd.f32 %v1417, %v1418
    %v1420 = vrot.slane %v1353, 4
    %v1421 = vadd.f32 %v1353, %v1420
    %v1422 = vrot.slane %v1421, 2
    %v1423 = vadd.f32 %v1421, %v1422
    %v1424 = vrot.slane %v1423, 1
    %v1425 = vadd.f32 %v1423, %v1424
    %v1426 = vrot.slane %v1405, 4
    %v1427 = vadd.f32 %v1405, %v1426
    %v1428 = vrot.slane %v1427, 2
    %v1429 = vadd.f32 %v1427, %v1428
    %v1430 = vrot.slane %v1429, 1
    %v1431 = vadd.f32 %v1429, %v1430
    %v1432 = vadd.f32 %v1413, 0.0
    %v1433 = vadd.f32 %v1419, 0.0
    %v1434 = vadd.f32 %v1425, 0.0
    %v1435 = vadd.f32 %v1431, 0.0
    %v1436 = vmul.f32 %v1249, %v1249
    %v1437 = vmul.f32 %v1301, %v1301
    %v1438 = vmul.f32 %v1353, %v1353
    %v1439 = vmul.f32 %v1405, %v1405
    %v1440 = vrot.slane %v1436, 4
    %v1441 = vadd.f32 %v1436, %v1440
    %v1442 = vrot.slane %v1441, 2
    %v1443 = vadd.f32 %v1441, %v1442
    %v1444 = vrot.slane %v1443, 1
    %v1445 = vadd.f32 %v1443, %v1444
    %v1446 = vrot.slane %v1437, 4
    %v1447 = vadd.f32 %v1437, %v1446
    %v1448 = vrot.slane %v1447, 2
    %v1449 = vadd.f32 %v1447, %v1448
    %v1450 = vrot.slane %v1449, 1
    %v1451 = vadd.f32 %v1449, %v1450
    %v1452 = vrot.slane %v1438, 4
    %v1453 = vadd.f32 %v1438, %v1452
    %v1454 = vrot.slane %v1453, 2
    %v1455 = vadd.f32 %v1453, %v1454
    %v1456 = vrot.slane %v1455, 1
    %v1457 = vadd.f32 %v1455, %v1456
    %v1458 = vrot.slane %v1439, 4
    %v1459 = vadd.f32 %v1439, %v1458
    %v1460 = vrot.slane %v1459, 2
    %v1461 = vadd.f32 %v1459, %v1460
    %v1462 = vrot.slane %v1461, 1
    %v1463 = vadd.f32 %v1461, %v1462
    %v1464 = vadd.f32 %v1445, 0.0
    %v1465 = vadd.f32 %v1451, 0.0
    %v1466 = vadd.f32 %v1457, 0.0
    %v1467 = vadd.f32 %v1463, 0.0
    %v1468 = vmul.f32 %v1432, 0.125
    %v1469 = vmul.f32 %v1433, 0.125
    %v1470 = vmul.f32 %v1434, 0.125
    %v1471 = vmul.f32 %v1435, 0.125
    %v1472 = vmul.f32 %v1464, 0.125
    %v1473 = vmul.f32 %v1465, 0.125
    %v1474 = vmul.f32 %v1466, 0.125
    %v1475 = vmul.f32 %v1467, 0.125
    %v1476 = vmul.f32 %v1468, %v1468
    %v1477 = vmul.f32 %v1469, %v1469
    %v1478 = vmul.f32 %v1470, %v1470
    %v1479 = vmul.f32 %v1471, %v1471
    %v1480 = vsub.f32 %v1472, %v1476
    %v1481 = vsub.f32 %v1473, %v1477
    %v1482 = vsub.f32 %v1474, %v1478
    %v1483 = vsub.f32 %v1475, %v1479
    %v1484 = vmax.f32 %v1480, 0.0
    %v1485 = vmax.f32 %v1481, 0.0
    %v1486 = vmax.f32 %v1482, 0.0
    %v1487 = vmax.f32 %v1483, 0.0
    %v1488 = vld [vmem:[%s5] sm:$0xf]
    %v1489 = vadd.f32 %v1484, 1e-05
    %v1490 = vadd.f32 %v1485, 1e-05
    %v1491 = vadd.f32 %v1486, 1e-05
    %v1492 = vadd.f32 %v1487, 1e-05
    %v1493 = vrsqrt.pop %v1489
    %v1494 = vmul.f32 %v1493, %v1489
    %v1495 = vmul.f32 %v1494, %v1493
    %v1496 = vmul.f32 0.5, %v1495
    %v1497 = vsub.f32 1.5, %v1496
    %v1498 = vmul.f32 %v1493, %v1497
    %vm1499 = vweird.f32 %v1489
    %vm1500 = vweird.f32 %v1493
    %vm1501 = vmor %vm1499, %vm1500
    %v1502 = vsel %vm1501, %v1493, %v1498
    %v1503 = vrsqrt.pop %v1490
    %v1504 = vmul.f32 %v1503, %v1490
    %v1505 = vmul.f32 %v1504, %v1503
    %v1506 = vmul.f32 0.5, %v1505
    %v1507 = vsub.f32 1.5, %v1506
    %v1508 = vmul.f32 %v1503, %v1507
    %vm1509 = vweird.f32 %v1490
    %vm1510 = vweird.f32 %v1503
    %vm1511 = vmor %vm1509, %vm1510
    %v1512 = vsel %vm1511, %v1503, %v1508
    %v1513 = vrsqrt.pop %v1491
    %v1514 = vmul.f32 %v1513, %v1491
    %v1515 = vmul.f32 %v1514, %v1513
    %v1516 = vmul.f32 0.5, %v1515
    %v1517 = vsub.f32 1.5, %v1516
    %v1518 = vmul.f32 %v1513, %v1517
    %vm1519 = vweird.f32 %v1491
    %vm1520 = vweird.f32 %v1513
    %vm1521 = vmor %vm1519, %vm1520
    %v1522 = vsel %vm1521, %v1513, %v1518
    %v1523 = vrsqrt.pop %v1492
    %v1524 = vmul.f32 %v1523, %v1492
    %v1525 = vmul.f32 %v1524, %v1523
    %v1526 = vmul.f32 0.5, %v1525
    %v1527 = vsub.f32 1.5, %v1526
    %v1528 = vmul.f32 %v1523, %v1527
    %vm1529 = vweird.f32 %v1492
    %vm1530 = vweird.f32 %v1523
    %vm1531 = vmor %vm1529, %vm1530
    %v1532 = vsel %vm1531, %v1523, %v1528
    %v1537 = vrot.slane %v1512, 7
    %v1538 = vrot.slane %v1522, 6
    %v1539 = vrot.slane %v1532, 5
    %v1540 = vsel %vm373, %v1502, %v1537
    %v1541 = vsel %vm375, %v1538, %v1539
    %v1542 = vsel %vm377, %v1540, %v1541
    %v1544 = vmul.f32 %v1488, %v1542
    %v1545 = vld [vmem:[#allocation11] sm:$0xf]
    %v1547 = vperm.slane %v1544, 0
    %v1548 = vperm.slane %v1544, 1
    %v1549 = vperm.slane %v1544, 2
    %v1550 = vperm.slane %v1544, 3
    %v1555 = vmul.f32 %v1468, %v1547
    %v1556 = vmul.f32 %v1469, %v1548
    %v1557 = vmul.f32 %v1470, %v1549
    %v1558 = vmul.f32 %v1471, %v1550
    %v1563 = vrot.slane %v1556, 7
    %v1564 = vrot.slane %v1557, 6
    %v1565 = vrot.slane %v1558, 5
    %v1566 = vsel %vm373, %v1555, %v1563
    %v1567 = vsel %vm375, %v1564, %v1565
    %v1568 = vsel %vm377, %v1566, %v1567
    %v1570 = vsub.f32 %v1545, %v1568
    %v1571 = vmul.f32 %v1249, %v1547
    %v1572 = vmul.f32 %v1301, %v1548
    %v1573 = vmul.f32 %v1353, %v1549
    %v1574 = vmul.f32 %v1405, %v1550
    %v1576 = vperm.slane %v1570, 0
    %v1577 = vperm.slane %v1570, 1
    %v1578 = vperm.slane %v1570, 2
    %v1579 = vperm.slane %v1570, 3
    %v1584 = vadd.f32 %v1571, %v1576
    %v1585 = vadd.f32 %v1572, %v1577
    %v1586 = vadd.f32 %v1573, %v1578
    %v1587 = vadd.f32 %v1574, %v1579
    %v1588 = vmax.f32 %v1584, 0.0
    %v1589 = vmax.f32 %v1585, 0.0
    %v1590 = vmax.f32 %v1586, 0.0
    %v1591 = vmax.f32 %v1587, 0.0
    %v1592 = vpack.c.bf16 %v1588, %v1588
    %v1593 = vpack.c.bf16 %v1589, %v1589
    %v1594 = vpack.c.bf16 %v1590, %v1590
    %v1595 = vpack.c.bf16 %v1591, %v1591
    %v1596 = vld [vmem:[#allocation13] sm:$0xf]
    %v1597 = vld [vmem:[#allocation13 + $0x4] sm:$0xf]
    %v1598 = vld [vmem:[#allocation13 + $0x8] sm:$0xf]
    %v1599 = vld [vmem:[#allocation13 + $0xc] sm:$0xf]
    %v1600 = vld [vmem:[#allocation13 + $0x10] sm:$0xf]
    %v1601 = vld [vmem:[#allocation13 + $0x14] sm:$0xf]
    %v1602 = vld [vmem:[#allocation13 + $0x18] sm:$0xf]
    %v1603 = vld [vmem:[#allocation13 + $0x1c] sm:$0xf]
    %v1604 = vld [vmem:[#allocation13 + $0x20] sm:$0xf]
    %v1605 = vld [vmem:[#allocation13 + $0x24] sm:$0xf]
    %v1606 = vld [vmem:[#allocation13 + $0x28] sm:$0xf]
    %v1607 = vld [vmem:[#allocation13 + $0x2c] sm:$0xf]
    %v1608 = vld [vmem:[#allocation13 + $0x30] sm:$0xf]
    %v1609 = vld [vmem:[#allocation13 + $0x34] sm:$0xf]
    %v1610 = vld [vmem:[#allocation13 + $0x38] sm:$0xf]
    %v1611 = vld [vmem:[#allocation13 + $0x3c] sm:$0xf]
    %v1612 = vld [vmem:[#allocation13 + $0x40] sm:$0xf]
    %v1613 = vld [vmem:[#allocation13 + $0x44] sm:$0xf]
    %v1614 = vld [vmem:[#allocation13 + $0x48] sm:$0xf]
    %v1615 = vld [vmem:[#allocation13 + $0x4c] sm:$0xf]
    %v1616 = vld [vmem:[#allocation13 + $0x50] sm:$0xf]
    %v1617 = vld [vmem:[#allocation13 + $0x54] sm:$0xf]
    %v1618 = vld [vmem:[#allocation13 + $0x58] sm:$0xf]
    %v1619 = vld [vmem:[#allocation13 + $0x5c] sm:$0xf]
    %v1620 = vld [vmem:[#allocation13 + $0x60] sm:$0xf]
    %v1621 = vld [vmem:[#allocation13 + $0x64] sm:$0xf]
    %v1622 = vld [vmem:[#allocation13 + $0x68] sm:$0xf]
    %v1623 = vld [vmem:[#allocation13 + $0x6c] sm:$0xf]
    %v1624 = vld [vmem:[#allocation13 + $0x70] sm:$0xf]
    %v1625 = vld [vmem:[#allocation13 + $0x74] sm:$0xf]
    %v1626 = vld [vmem:[#allocation13 + $0x78] sm:$0xf]
    %v1627 = vld [vmem:[#allocation13 + $0x7c] sm:$0xf]
    %v1628 = vld [vmem:[#allocation13 + $0x80] sm:$0xf]
    %v1629 = vld [vmem:[#allocation13 + $0x84] sm:$0xf]
    %v1630 = vld [vmem:[#allocation13 + $0x88] sm:$0xf]
    %v1631 = vld [vmem:[#allocation13 + $0x8c] sm:$0xf]
    %v1632 = vld [vmem:[#allocation13 + $0x90] sm:$0xf]
    %v1633 = vld [vmem:[#allocation13 + $0x94] sm:$0xf]
    %v1634 = vld [vmem:[#allocation13 + $0x98] sm:$0xf]
    %v1635 = vld [vmem:[#allocation13 + $0x9c] sm:$0xf]
    %v1636 = vld [vmem:[#allocation13 + $0xa0] sm:$0xf]
    %v1637 = vld [vmem:[#allocation13 + $0xa4] sm:$0xf]
    %v1638 = vld [vmem:[#allocation13 + $0xa8] sm:$0xf]
    %v1639 = vld [vmem:[#allocation13 + $0xac] sm:$0xf]
    %v1640 = vld [vmem:[#allocation13 + $0xb0] sm:$0xf]
    %v1641 = vld [vmem:[#allocation13 + $0xb4] sm:$0xf]
    %v1642 = vld [vmem:[#allocation13 + $0xb8] sm:$0xf]
    %v1643 = vld [vmem:[#allocation13 + $0xbc] sm:$0xf]
    %v1644 = vld [vmem:[#allocation13 + $0xc0] sm:$0xf]
    %v1645 = vld [vmem:[#allocation13 + $0xc4] sm:$0xf]
    %v1646 = vld [vmem:[#allocation13 + $0xc8] sm:$0xf]
    %v1647 = vld [vmem:[#allocation13 + $0xcc] sm:$0xf]
    %v1648 = vld [vmem:[#allocation13 + $0xd0] sm:$0xf]
    %v1649 = vld [vmem:[#allocation13 + $0xd4] sm:$0xf]
    %v1650 = vld [vmem:[#allocation13 + $0xd8] sm:$0xf]
    %v1651 = vld [vmem:[#allocation13 + $0xdc] sm:$0xf]
    %v1652 = vld [vmem:[#allocation13 + $0xe0] sm:$0xf]
    %v1653 = vld [vmem:[#allocation13 + $0xe4] sm:$0xf]
    %v1654 = vld [vmem:[#allocation13 + $0xe8] sm:$0xf]
    %v1655 = vld [vmem:[#allocation13 + $0xec] sm:$0xf]
    %v1656 = vld [vmem:[#allocation13 + $0xf0] sm:$0xf]
    %v1657 = vld [vmem:[#allocation13 + $0xf4] sm:$0xf]
    %v1658 = vld [vmem:[#allocation13 + $0xf8] sm:$0xf]
    %v1659 = vld [vmem:[#allocation13 + $0xfc] sm:$0xf]
    %v1660 = vld [vmem:[%s8] sm:$0x1]
    %v1662 = vperm.slane %v1660, 0
    %v1728 = vunpack.c.l.b16 %v1596
    %v1729 = vunpack.c.l.b16 %v1597
    %v1730 = vunpack.c.l.b16 %v1598
    %v1731 = vunpack.c.l.b16 %v1599
    %v1732 = vunpack.c.l.b16 %v1600
    %v1733 = vunpack.c.l.b16 %v1601
    %v1734 = vunpack.c.l.b16 %v1602
    %v1735 = vunpack.c.l.b16 %v1603
    %v1736 = vunpack.c.l.b16 %v1604
    %v1737 = vunpack.c.l.b16 %v1605
    %v1738 = vunpack.c.l.b16 %v1606
    %v1739 = vunpack.c.l.b16 %v1607
    %v1740 = vunpack.c.l.b16 %v1608
    %v1741 = vunpack.c.l.b16 %v1609
    %v1742 = vunpack.c.l.b16 %v1610
    %v1743 = vunpack.c.l.b16 %v1611
    %v1744 = vunpack.c.l.b16 %v1612
    %v1745 = vunpack.c.l.b16 %v1613
    %v1746 = vunpack.c.l.b16 %v1614
    %v1747 = vunpack.c.l.b16 %v1615
    %v1748 = vunpack.c.l.b16 %v1616
    %v1749 = vunpack.c.l.b16 %v1617
    %v1750 = vunpack.c.l.b16 %v1618
    %v1751 = vunpack.c.l.b16 %v1619
    %v1752 = vunpack.c.l.b16 %v1620
    %v1753 = vunpack.c.l.b16 %v1621
    %v1754 = vunpack.c.l.b16 %v1622
    %v1755 = vunpack.c.l.b16 %v1623
    %v1756 = vunpack.c.l.b16 %v1624
    %v1757 = vunpack.c.l.b16 %v1625
    %v1758 = vunpack.c.l.b16 %v1626
    %v1759 = vunpack.c.l.b16 %v1627
    %v1760 = vunpack.c.l.b16 %v1628
    %v1761 = vunpack.c.l.b16 %v1629
    %v1762 = vunpack.c.l.b16 %v1630
    %v1763 = vunpack.c.l.b16 %v1631
    %v1764 = vunpack.c.l.b16 %v1632
    %v1765 = vunpack.c.l.b16 %v1633
    %v1766 = vunpack.c.l.b16 %v1634
    %v1767 = vunpack.c.l.b16 %v1635
    %v1768 = vunpack.c.l.b16 %v1636
    %v1769 = vunpack.c.l.b16 %v1637
    %v1770 = vunpack.c.l.b16 %v1638
    %v1771 = vunpack.c.l.b16 %v1639
    %v1772 = vunpack.c.l.b16 %v1640
    %v1773 = vunpack.c.l.b16 %v1641
    %v1774 = vunpack.c.l.b16 %v1642
    %v1775 = vunpack.c.l.b16 %v1643
    %v1776 = vunpack.c.l.b16 %v1644
    %v1777 = vunpack.c.l.b16 %v1645
    %v1778 = vunpack.c.l.b16 %v1646
    %v1779 = vunpack.c.l.b16 %v1647
    %v1780 = vunpack.c.l.b16 %v1648
    %v1781 = vunpack.c.l.b16 %v1649
    %v1782 = vunpack.c.l.b16 %v1650
    %v1783 = vunpack.c.l.b16 %v1651
    %v1784 = vunpack.c.l.b16 %v1652
    %v1785 = vunpack.c.l.b16 %v1653
    %v1786 = vunpack.c.l.b16 %v1654
    %v1787 = vunpack.c.l.b16 %v1655
    %v1788 = vunpack.c.l.b16 %v1656
    %v1789 = vunpack.c.l.b16 %v1657
    %v1790 = vunpack.c.l.b16 %v1658
    %v1791 = vunpack.c.l.b16 %v1659
    %v1792 = vpack.c.b16 %v1729, %v1728
    %v1793 = vpack.c.b16 %v1731, %v1730
    %v1794 = vpack.c.b16 %v1733, %v1732
    %v1795 = vpack.c.b16 %v1735, %v1734
    %v1796 = vpack.c.b16 %v1737, %v1736
    %v1797 = vpack.c.b16 %v1739, %v1738
    %v1798 = vpack.c.b16 %v1741, %v1740
    %v1799 = vpack.c.b16 %v1743, %v1742
    %v1800 = vpack.c.b16 %v1745, %v1744
    %v1801 = vpack.c.b16 %v1747, %v1746
    %v1802 = vpack.c.b16 %v1749, %v1748
    %v1803 = vpack.c.b16 %v1751, %v1750
    %v1804 = vpack.c.b16 %v1753, %v1752
    %v1805 = vpack.c.b16 %v1755, %v1754
    %v1806 = vpack.c.b16 %v1757, %v1756
    %v1807 = vpack.c.b16 %v1759, %v1758
    %v1808 = vpack.c.b16 %v1761, %v1760
    %v1809 = vpack.c.b16 %v1763, %v1762
    %v1810 = vpack.c.b16 %v1765, %v1764
    %v1811 = vpack.c.b16 %v1767, %v1766
    %v1812 = vpack.c.b16 %v1769, %v1768
    %v1813 = vpack.c.b16 %v1771, %v1770
    %v1814 = vpack.c.b16 %v1773, %v1772
    %v1815 = vpack.c.b16 %v1775, %v1774
    %v1816 = vpack.c.b16 %v1777, %v1776
    %v1817 = vpack.c.b16 %v1779, %v1778
    %v1818 = vpack.c.b16 %v1781, %v1780
    %v1819 = vpack.c.b16 %v1783, %v1782
    %v1820 = vpack.c.b16 %v1785, %v1784
    %v1821 = vpack.c.b16 %v1787, %v1786
    %v1822 = vpack.c.b16 %v1789, %v1788
    %v1823 = vpack.c.b16 %v1791, %v1790
    %1856 = vmatpush.bf16.msra.mxu0 %v1799
    %1857 = vmatpush.bf16.msra.mxu0 %v1798
    %1858 = vmatpush.bf16.msra.mxu0 %v1797
    %1859 = vmatpush.bf16.msra.mxu0 %v1796
    %1860 = vmatpush.bf16.msra.mxu0 %v1795
    %1861 = vmatpush.bf16.msra.mxu0 %v1794
    %1862 = vmatpush.bf16.msra.mxu0 %v1793
    %1863 = vmatpush.bf16.msra.mxu0 %v1792
    %1864 = vmatmul.bf16.gmra.mxu0 %v1592
    %v1865 = vpop.f32.mrf.mxu0
    %v1866 = vadd.f32 %v1662, %v1865
    %v1867 = vpop.f32.mrf.mxu0
    %1868 = vdwg.mxu0
    %1869 = vmatpush.bf16.msra.mxu0 %v1807
    %1870 = vmatpush.bf16.msra.mxu0 %v1806
    %1871 = vmatpush.bf16.msra.mxu0 %v1805
    %1872 = vmatpush.bf16.msra.mxu0 %v1804
    %1873 = vmatpush.bf16.msra.mxu0 %v1803
    %1874 = vmatpush.bf16.msra.mxu0 %v1802
    %1875 = vmatpush.bf16.msra.mxu0 %v1801
    %1876 = vmatpush.bf16.msra.mxu0 %v1800
    %1877 = vmatmul.bf16.gmra.mxu0 %v1593
    %v1878 = vpop.f32.mrf.mxu0
    %v1879 = vadd.f32 %v1866, %v1878
    %v1880 = vpop.f32.mrf.mxu0
    %1881 = vdwg.mxu0
    %1882 = vmatpush.bf16.msra.mxu0 %v1815
    %1883 = vmatpush.bf16.msra.mxu0 %v1814
    %1884 = vmatpush.bf16.msra.mxu0 %v1813
    %1885 = vmatpush.bf16.msra.mxu0 %v1812
    %1886 = vmatpush.bf16.msra.mxu0 %v1811
    %1887 = vmatpush.bf16.msra.mxu0 %v1810
    %1888 = vmatpush.bf16.msra.mxu0 %v1809
    %1889 = vmatpush.bf16.msra.mxu0 %v1808
    %1890 = vmatmul.bf16.gmra.mxu0 %v1594
    %v1891 = vpop.f32.mrf.mxu0
    %v1892 = vadd.f32 %v1879, %v1891
    %v1893 = vpop.f32.mrf.mxu0
    %1894 = vdwg.mxu0
    %1895 = vmatpush.bf16.msra.mxu0 %v1823
    %1896 = vmatpush.bf16.msra.mxu0 %v1822
    %1897 = vmatpush.bf16.msra.mxu0 %v1821
    %1898 = vmatpush.bf16.msra.mxu0 %v1820
    %1899 = vmatpush.bf16.msra.mxu0 %v1819
    %1900 = vmatpush.bf16.msra.mxu0 %v1818
    %1901 = vmatpush.bf16.msra.mxu0 %v1817
    %1902 = vmatpush.bf16.msra.mxu0 %v1816
    %1903 = vmatmul.bf16.gmra.mxu0 %v1595
    %v1904 = vpop.f32.mrf.mxu0
    %v1905 = vadd.f32 %v1892, %v1904
    %v1906 = vpop.f32.mrf.mxu0
    %1907 = vdwg.mxu0
    %v1908 = vpack.c.bf16 %v1905, %v1905
    %1909 = vst [vmem:[#allocation14] sm:$0xf] %v1908
    // Predicated region
    $region66: #{tpu_custom_call.1} parent=1 // pred_check
      _
    $region67: #{tpu_custom_call.1} parent=1 // pred_check_branch
      %1911 = sbr.rel (0) target = $region69
    $region68: #{tpu_custom_call.1} parent=1 // pred_region
      %1913 = vsyncadd [#allocation4], 0
      %s1915 = sshll.u32 [#allocation14], 4
      %s1916 = int_to_ptr.vmem [resolvable:$true] %s1915
      %s1917 = sshll.u32 %s9, 4
      %s1918 = int_to_ptr.hbm [resolvable:$true] %s1917
      %1920 = dma.vmem_to_hbm [thread:$0]  %s1916, 64, %s1918, [#allocation4]
    $region69: #{tpu_custom_call.1} parent=1 // pred_fallthru
      _
    // Predicated region
    $region70: #{tpu_custom_call.1} parent=1 // pred_check
      _
    $region71: #{tpu_custom_call.1} parent=1 // pred_check_branch
      %1922 = sbr.rel (0) target = $region73
    $region72: #{tpu_custom_call.1} parent=1 // pred_region
      %1924 = dma.done [#allocation4], 64
    $region73: #{tpu_custom_call.1} parent=1 // pred_fallthru
      _
    %1925 = vsyncpa [#allocation3], 1
    %1926 = vsyncpa [#allocation6], 1
    %1927 = vsyncpa [#allocation9], 1
    %1928 = vsyncpa [#allocation12], 1
    %1929 = vsyncpa [#allocation4], 1

</llo_original>
